<compile_context>
chip_gen: v7x
topology: tpu7x:2x2x1
jax: 0.10.0
libtpu: 0.0.40
codegen_flags: <defaults>
</compile_context>

<pallas_src>
import jax
import jax.numpy as jnp
from jax.experimental import pallas as pl
from jax.experimental.pallas import tpu as pltpu


def _round_up(x, m):
    return (x + m - 1) // m * m


# --------------------------------------------------------------------------------------
# Fused kernel: bert_linear (merged branch) -> GCN1 -> GCN2 -> aspect attention -> fc
# --------------------------------------------------------------------------------------

def _classifier_kernel(merged_ref, pw_ref, adj_ref, amask_ref, syn_ref, bert_ref,
                       bw_ref, g1w_ref, g1b_ref, g2w_ref, g2b_ref, fcw_ref, fcb_ref,
                       gcn_ref, logits_ref, alpha_ref):
    # Per-batch-block views:
    #   merged (bb,SP,BK) f32 ; pw (bb,SP,1) ; adj (bb,SP,SP) f32 ; amask (bb,SP,1)
    #   syn (bb,1,SP) ; bert (bb,1,DP)
    #   bw (BK,DP) bf16 ; gc*_w (DP,DP) bf16 ; gc*_b (1,DP) f32 ; fcw (DP,OUT) bf16 ; fcb (1,OUT)
    # Outputs: gcn (bb,SP,DP) f32 ; logits (bb,1,OUT) lane-dense ; alpha (bb,1,SA) lane-dense.
    bb, SP, BK = merged_ref.shape
    DP = bw_ref.shape[1]
    SA = alpha_ref.shape[2]

    # ---- bert_linear fused in: text_out = merged_layer @ W_bert (dropout = identity, eval) ----
    x2d = merged_ref[...].reshape(bb * SP, BK).astype(jnp.bfloat16)
    text = jnp.dot(x2d, bw_ref[...],
                   preferred_element_type=jnp.float32).reshape(bb, SP, DP)

    # ---- adjacency normalizer: one approx reciprocal (EUP), reused by both GCN layers ----
    adj_f32 = adj_ref[...]
    adj_bf = adj_f32.astype(jnp.bfloat16)
    inv_denom = pl.reciprocal(jnp.sum(adj_f32, axis=2, keepdims=True) + 1.0,
                              approx=True)                                  # (bb,SP,1)

    def gcn_layer(x, w_ref, b_ref):
        # shared weight -> flatten batch so the MXU sees M = bb*SP
        h = jnp.dot(x.reshape(bb * SP, DP).astype(jnp.bfloat16), w_ref[...],
                    preferred_element_type=jnp.float32).reshape(bb, SP, DP)
        agg = jnp.einsum('bij,bjd->bid', adj_bf, h.astype(jnp.bfloat16),
                         preferred_element_type=jnp.float32)
        return jnp.maximum(agg * inv_denom + b_ref[...], 0.0)              # ReLU

    # Layer 1 gets the position-weighted input; layer 2 gets plain h1 (reference does
    # `weighted_x = x` before gc2 -- no re-weighting).
    h1 = gcn_layer(text * pw_ref[...], g1w_ref, g1b_ref)
    h2 = gcn_layer(h1, g2w_ref, g2b_ref)
    gcn_ref[...] = h2

    # ---- aspect attention ----
    # sum_i (mask*h2)[i,:] @ sent^T == colsum(mask*h2) @ sent^T ; fused with the bert_out
    # matvec into one pass over `text`:  mixed = (colsum + bert_out) @ sent^T.
    q = jnp.sum(amask_ref[...] * h2, axis=1) + bert_ref[:, 0, :]            # (bb, DP)
    mixed = jnp.sum(q[:, None, :] * text, axis=-1)                          # (bb, SP)
    # syn = -syn_dist for real tokens, -1e9 for padding; `> -6` == the masked_fill mask.
    mixed = jnp.where(syn_ref[:, 0, :] > -6.0, mixed, -1.0e9)

    # stable softmax over the sequence dim (all-masked rows degenerate to uniform,
    # identical to F.softmax on an all -1e9 row)
    mixed = mixed - jnp.max(mixed, axis=-1, keepdims=True)
    e = jnp.exp(mixed)
    alpha = e / jnp.sum(e, axis=-1, keepdims=True)                          # (bb, SP)

    pooled = jnp.sum(alpha[:, :, None] * text, axis=1)                      # (bb, DP)
    logits = jnp.dot(pooled.astype(jnp.bfloat16), fcw_ref[...],
                     preferred_element_type=jnp.float32) + fcb_ref[...]     # (bb, OUT)

    logits_ref[...] = logits[:, None, :]
    if SA == SP:
        alpha_ref[...] = alpha[:, None, :]
    else:
        # lane-padded alpha slab: real weights in the first SP lanes, zeros after.
        alpha_ref[:, :, :SP] = alpha[:, None, :]
        alpha_ref[:, :, SP:] = jnp.zeros((bb, 1, SA - SP), jnp.float32)


def classifier_fused(merged, pw, adj, amask, syn, bert_out, wp, *, block_b=8):
    """merged (B,SP,BK) f32, pw/amask (B,SP,1), adj (B,SP,SP) f32, syn (B,1,SP),
    bert_out (B,1,DP); wp holds lane-padded bf16 weights / f32 biases."""
    B, SP, BK = merged.shape
    DP = wp["bert_wT"].shape[1]
    OUT = wp["fc_wT"].shape[1]
    SA = _round_up(SP, 128)

    # Largest batch block <= block_b that divides B (no padded batch rows / no OOB tail).
    # On v7x prefer a block_b such that B // bb is even so both TensorCores stay busy.
    bb = min(block_b, B)
    while B % bb:
        bb -= 1

    # NOTE: per-step VMEM at production sizes (bb=8, SP~112, BK=1024, DP=640) is a few MiB
    # per operand, well under v7x's 64 MiB; on v5e lower block_b or raise vmem_limit_bytes.
    gcn, logits, alpha = pl.pallas_call(
        _classifier_kernel,
        grid=(B // bb,),
        in_specs=[
            pl.BlockSpec((bb, SP, BK), lambda b: (b, 0, 0)),   # merged_layer (f32, cast in-kernel)
            pl.BlockSpec((bb, SP, 1), lambda b: (b, 0, 0)),    # position weight
            pl.BlockSpec((bb, SP, SP), lambda b: (b, 0, 0)),   # adjacency (f32, cast in-kernel)
            pl.BlockSpec((bb, SP, 1), lambda b: (b, 0, 0)),    # aspect mask
            pl.BlockSpec((bb, 1, SP), lambda b: (b, 0, 0)),    # processed syn_dist
            pl.BlockSpec((bb, 1, DP), lambda b: (b, 0, 0)),    # bert_out (pooled branch)
            pl.BlockSpec((BK, DP), lambda b: (0, 0)),          # bert_linear weight (bf16)
            pl.BlockSpec((DP, DP), lambda b: (0, 0)),          # gc1 weight (bf16)
            pl.BlockSpec((1, DP), lambda b: (0, 0)),           # gc1 bias
            pl.BlockSpec((DP, DP), lambda b: (0, 0)),          # gc2 weight (bf16)
            pl.BlockSpec((1, DP), lambda b: (0, 0)),           # gc2 bias
            pl.BlockSpec((DP, OUT), lambda b: (0, 0)),         # fc weight (bf16, lane-padded)
            pl.BlockSpec((1, OUT), lambda b: (0, 0)),          # fc bias (lane-padded)
        ],
        out_specs=[
            pl.BlockSpec((bb, SP, DP), lambda b: (b, 0, 0)),
            pl.BlockSpec((bb, 1, OUT), lambda b: (b, 0, 0)),
            pl.BlockSpec((bb, 1, SA), lambda b: (b, 0, 0)),
        ],
        out_shape=[
            jax.ShapeDtypeStruct((B, SP, DP), jnp.float32),
            jax.ShapeDtypeStruct((B, 1, OUT), jnp.float32),
            jax.ShapeDtypeStruct((B, 1, SA), jnp.float32),
        ],
        compiler_params=pltpu.CompilerParams(dimension_semantics=("parallel",)),
    )(merged, pw, adj, amask, syn, bert_out,
      wp["bert_wT"], wp["gc1_w"], wp["gc1_b"], wp["gc2_w"], wp["gc2_b"],
      wp["fc_wT"], wp["fc_b"])
    return gcn, logits, alpha


# --------------------------------------------------------------------------------------
# Weight prep: lane-pad D / polarity dims to multiples of 128 (zero pads are math-neutral),
# pre-cast matmul weights to bf16 (one-time, tiny).
# --------------------------------------------------------------------------------------

def prepare_padded_params(params):
    bert_wT = params["bert_linear_wT"]                     # (bert_dim, D)
    BK, D = bert_wT.shape
    P = params["fc_wT"].shape[1]
    DP = _round_up(D, 128)
    OUT = _round_up(max(P, 128), 128)

    def pad2(a, r, c):
        return jnp.pad(a, ((0, r - a.shape[0]), (0, c - a.shape[1])))

    return {
        "bert_wT": pad2(bert_wT, BK, DP).astype(jnp.bfloat16),
        "gc1_w": pad2(params["gc1_w"], DP, DP).astype(jnp.bfloat16),
        "gc1_b": pad2(params["gc1_b"], 1, DP),
        "gc2_w": pad2(params["gc2_w"], DP, DP).astype(jnp.bfloat16),
        "gc2_b": pad2(params["gc2_b"], 1, DP),
        "fc_wT": pad2(params["fc_wT"], DP, OUT).astype(jnp.bfloat16),
        "fc_b": pad2(params["fc_b"], 1, OUT),
    }


# --------------------------------------------------------------------------------------
# Glue (vectorized versions of the python-loop weight/mask builders)
# --------------------------------------------------------------------------------------

def position_weight_vec(aspect_double_idx, text_len, aspect_len, seq_len):
    j = jnp.arange(seq_len, dtype=jnp.float32)[None, :]
    a_s = aspect_double_idx[:, 0:1].astype(jnp.float32)
    a_e = aspect_double_idx[:, 1:2].astype(jnp.float32)
    tl = text_len[:, None].astype(jnp.float32)
    # guard: context_len == 0 (all-aspect rows) would make the PyTorch reference divide
    # by zero; clamp to 1 so the kernel never sees Inf/NaN.
    cl = jnp.maximum((text_len - aspect_len)[:, None].astype(jnp.float32), 1.0)
    w = jnp.where(j < a_s, 1.0 - (a_s - j) / cl,
        jnp.where(j <= a_e, 0.0,
        jnp.where(j < tl, 1.0 - (j - a_e) / cl, 0.0)))
    return w.astype(jnp.float32)                                            # (B, SP)


def aspect_mask_vec(aspect_double_idx, seq_len):
    j = jnp.arange(seq_len)[None, :]
    a_s = aspect_double_idx[:, 0:1]
    a_e = aspect_double_idx[:, 1:2]
    return ((j >= a_s) & (j <= a_e)).astype(jnp.float32)                    # (B, SP)


# --------------------------------------------------------------------------------------
# DepGCNv2 forward (eval mode)
# --------------------------------------------------------------------------------------

def depgcn_v2_forward(params, text_indices, aspect_indices, left_indices,
                      adj, syn_dist, pooled_output, merged_layer, *, block_b=8):
    B, S = text_indices.shape
    D = params["bert_linear_wT"].shape[1]
    P = params["fc_wT"].shape[1]

    wp = prepare_padded_params(params)
    DP = wp["bert_wT"].shape[1]

    text_len = jnp.sum(text_indices != 0, axis=-1)
    aspect_len = jnp.sum(aspect_indices != 0, axis=-1)
    left_len = jnp.sum(left_indices != 0, axis=-1)
    aspect_double_idx = jnp.stack([left_len, left_len + aspect_len - 1], axis=1)

    # pooled branch: only B rows -> a plain wrapper jnp.dot; dropouts are identity (eval).
    bert_out = jnp.dot(pooled_output, params["bert_linear_wT"])             # (B, D) f32
    if DP != D:
        bert_out = jnp.pad(bert_out, ((0, 0), (0, DP - D)))

    # Pad sequence dim to a multiple of 16 (bf16 adj sublane packing); padded rows carry
    # zero adjacency / zero weights / -1e9 syn distance, so they are inert.
    SP = _round_up(S, 16)
    if SP != S:
        merged_layer = jnp.pad(merged_layer, ((0, 0), (0, SP - S), (0, 0)))
        adj = jnp.pad(adj, ((0, 0), (0, SP - S), (0, SP - S)))

    # syn_dist = (-syn_dist).masked_fill(text padding, -1e9)
    syn_proc = jnp.where(text_indices != 0, -syn_dist.astype(jnp.float32), -1.0e9)
    if SP != S:
        syn_proc = jnp.pad(syn_proc, ((0, 0), (0, SP - S)), constant_values=-1.0e9)

    pw = position_weight_vec(aspect_double_idx, text_len, aspect_len, SP)[..., None]  # (B,SP,1)
    amask = aspect_mask_vec(aspect_double_idx, SP)[..., None]                          # (B,SP,1)

    gcn_pad, logits_pad, alpha_pad = classifier_fused(
        merged_layer, pw, adj, amask, syn_proc[:, None, :], bert_out[:, None, :],
        wp, block_b=block_b)

    logits = logits_pad[:, 0, :P]
    alpha = alpha_pad[:, 0, :S]
    gcn_x = gcn_pad[:, :S, :D] if (SP != S or DP != D) else gcn_pad
    return logits, alpha, gcn_x


# --------------------------------------------------------------------------------------
# Deterministic parameter / input construction and demo run
# --------------------------------------------------------------------------------------

def make_params(key, hidden_dim, bert_dim, polarities_dim):
    D = 2 * hidden_dim
    k = jax.random.split(key, 6)
    # bert_linear: nn.Linear(bert_dim, 2*hidden, bias=False), xavier_uniform
    bound = (6.0 / (bert_dim + D)) ** 0.5
    bert_w = jax.random.uniform(k[0], (D, bert_dim), jnp.float32, -bound, bound)
    # GC weights are uninitialized FloatTensors in the reference; use small normals.
    gc1_w = 0.1 * jax.random.normal(k[1], (D, D), jnp.float32)
    gc1_b = 0.1 * jax.random.normal(k[2], (1, D), jnp.float32)
    gc2_w = 0.1 * jax.random.normal(k[3], (D, D), jnp.float32)
    gc2_b = 0.1 * jax.random.normal(k[4], (1, D), jnp.float32)
    # fc: uniform(-0.002, 0.002) weight, zero bias
    fc_w = jax.random.uniform(k[5], (polarities_dim, D), jnp.float32, -0.002, 0.002)
    fc_b = jnp.zeros((1, polarities_dim), jnp.float32)
    return {
        "bert_linear_wT": bert_w.T,   # (bert_dim, D)
        "gc1_w": gc1_w, "gc1_b": gc1_b,
        "gc2_w": gc2_w, "gc2_b": gc2_b,
        "fc_wT": fc_w.T, "fc_b": fc_b,
    }


if __name__ == "__main__":
    B, S = 2, 16
    hidden_dim = 64          # -> feature dim D = 2*hidden_dim = 128 (already lane-dense)
    bert_dim = 128           # (scaled-down stand-in for 1024)
    polarities_dim = 3
    D = 2 * hidden_dim

    key = jax.random.PRNGKey(0)
    kp, k1, k2, k3, k4 = jax.random.split(key, 5)
    params = make_params(kp, hidden_dim, bert_dim, polarities_dim)

    # token indices: row0 has 16 real tokens, row1 has 12 real tokens + 4 pad
    text_indices = jnp.array(
        [[5, 6, 7, 8, 9, 10, 11, 12, 13, 14, 15, 16, 17, 18, 19, 20],
         [3, 4, 5, 6, 7, 8, 9, 10, 11, 12, 13, 14, 0, 0, 0, 0]], dtype=jnp.int32)
    aspect_indices = jnp.array([[7, 8, 0, 0],
                                [4, 5, 0, 0]], dtype=jnp.int32)     # aspect_len = [2, 2]
    left_indices = jnp.array([[5, 6, 0, 0],
                              [3, 0, 0, 0]], dtype=jnp.int32)       # left_len = [2, 1]

    adj = jax.random.bernoulli(k1, 0.4, (B, S, S)).astype(jnp.float32)
    syn_dist = jax.random.randint(k2, (B, S), -8, 5).astype(jnp.int32)
    syn_dist = syn_dist.at[:, 0].set(0)   # keep at least one unmasked position per row

    pooled_output = jax.random.normal(k3, (B, bert_dim), jnp.float32)
    merged_layer = jax.random.normal(k4, (B, S, bert_dim), jnp.float32)

    fwd = jax.jit(depgcn_v2_forward)
    logits, alpha, gcn_x = fwd(params, text_indices, aspect_indices, left_indices,
                               adj, syn_dist, pooled_output, merged_layer)

    jax.block_until_ready((logits, alpha, gcn_x))
    assert logits.shape == (B, polarities_dim)
    assert alpha.shape == (B, S)
    assert gcn_x.shape == (B, S, D)
    assert bool(jnp.all(jnp.isfinite(logits)))
    assert bool(jnp.all(jnp.isfinite(alpha)))
    assert bool(jnp.all(jnp.isfinite(gcn_x)))
    # alpha rows are softmax distributions over the sequence
    assert bool(jnp.all(jnp.abs(jnp.sum(alpha, axis=-1) - 1.0) < 1e-3))
    print("KERNEL_OK")
</pallas_src>

<mosaic_0001>
module attributes {stable_mosaic.version = 11 : i64} {
  func.func @_classifier_kernel(%arg0: i32, %arg1: memref<2x16x128xf32, #tpu.memory_space<vmem>>, %arg2: memref<2x16x1xf32, #tpu.memory_space<vmem>>, %arg3: memref<2x16x16xf32, #tpu.memory_space<vmem>>, %arg4: memref<2x16x1xf32, #tpu.memory_space<vmem>>, %arg5: memref<2x1x16xf32, #tpu.memory_space<vmem>>, %arg6: memref<2x1x128xf32, #tpu.memory_space<vmem>>, %arg7: memref<128x128xbf16, #tpu.memory_space<vmem>>, %arg8: memref<128x128xbf16, #tpu.memory_space<vmem>>, %arg9: memref<1x128xf32, #tpu.memory_space<vmem>>, %arg10: memref<128x128xbf16, #tpu.memory_space<vmem>>, %arg11: memref<1x128xf32, #tpu.memory_space<vmem>>, %arg12: memref<128x128xbf16, #tpu.memory_space<vmem>>, %arg13: memref<1x128xf32, #tpu.memory_space<vmem>>, %arg14: memref<2x16x128xf32, #tpu.memory_space<vmem>>, %arg15: memref<2x1x128xf32, #tpu.memory_space<vmem>>, %arg16: memref<2x1x128xf32, #tpu.memory_space<vmem>>) attributes {dimension_semantics = [#tpu.dimension_semantics<parallel>], iteration_bounds = array<i64: 1>, scalar_prefetch = 0 : i64, scratch_operands = 0 : i64, tpu.core_type = #tpu.core_type<tc>, window_params = [{transform_indices = @transform_0, window_bounds = array<i64: 2, 16, 128>}, {transform_indices = @transform_1, window_bounds = array<i64: 2, 16, 1>}, {transform_indices = @transform_2, window_bounds = array<i64: 2, 16, 16>}, {transform_indices = @transform_3, window_bounds = array<i64: 2, 16, 1>}, {transform_indices = @transform_4, window_bounds = array<i64: 2, 1, 16>}, {transform_indices = @transform_5, window_bounds = array<i64: 2, 1, 128>}, {pipeline_mode = #tpu.pipeline_mode<synchronous>, transform_indices = @transform_6, window_bounds = array<i64: 128, 128>}, {pipeline_mode = #tpu.pipeline_mode<synchronous>, transform_indices = @transform_7, window_bounds = array<i64: 128, 128>}, {pipeline_mode = #tpu.pipeline_mode<synchronous>, transform_indices = @transform_8, window_bounds = array<i64: 1, 128>}, {pipeline_mode = #tpu.pipeline_mode<synchronous>, transform_indices = @transform_9, window_bounds = array<i64: 128, 128>}, {pipeline_mode = #tpu.pipeline_mode<synchronous>, transform_indices = @transform_10, window_bounds = array<i64: 1, 128>}, {pipeline_mode = #tpu.pipeline_mode<synchronous>, transform_indices = @transform_11, window_bounds = array<i64: 128, 128>}, {pipeline_mode = #tpu.pipeline_mode<synchronous>, transform_indices = @transform_12, window_bounds = array<i64: 1, 128>}, {transform_indices = @transform_13, window_bounds = array<i64: 2, 16, 128>}, {transform_indices = @transform_14, window_bounds = array<i64: 2, 1, 128>}, {transform_indices = @transform_15, window_bounds = array<i64: 2, 1, 128>}]} {
    %c0 = arith.constant 0 : index
    %c0_0 = arith.constant 0 : index
    %c0_1 = arith.constant 0 : index
    %0 = vector.load %arg1[%c0, %c0_0, %c0_1] : memref<2x16x128xf32, #tpu.memory_space<vmem>>, vector<2x16x128xf32>
    %1 = vector.shape_cast %0 : vector<2x16x128xf32> to vector<32x128xf32>
    %2 = arith.truncf %1 : vector<32x128xf32> to vector<32x128xbf16>
    %c0_2 = arith.constant 0 : index
    %c0_3 = arith.constant 0 : index
    %3 = vector.load %arg7[%c0_2, %c0_3] : memref<128x128xbf16, #tpu.memory_space<vmem>>, vector<128x128xbf16>
    %cst = arith.constant dense<0.000000e+00> : vector<32x128xf32>
    %4 = tpu.matmul %2, %3, %cst {dimension_numbers = #tpu.dot_dimension_numbers<[1], [0], [0], [1], [0, 0, 1, 1], [], []>} : vector<32x128xbf16>, vector<128x128xbf16>, vector<32x128xf32> -> vector<32x128xf32>
    %5 = vector.shape_cast %4 : vector<32x128xf32> to vector<2x16x128xf32>
    %c0_4 = arith.constant 0 : index
    %c0_5 = arith.constant 0 : index
    %c0_6 = arith.constant 0 : index
    %6 = vector.load %arg3[%c0_4, %c0_5, %c0_6] : memref<2x16x16xf32, #tpu.memory_space<vmem>>, vector<2x16x16xf32>
    %7 = arith.truncf %6 : vector<2x16x16xf32> to vector<2x16x16xbf16>
    %cst_7 = arith.constant dense<0.000000e+00> : vector<2x16xf32>
    %8 = vector.multi_reduction <add>, %6, %cst_7 [2] : vector<2x16x16xf32> to vector<2x16xf32>
    %9 = vector.shape_cast %8 : vector<2x16xf32> to vector<2x16x1xf32>
    %cst_8 = arith.constant 1.000000e+00 : f32
    %10 = vector.broadcast %cst_8 : f32 to vector<2x16x1xf32>
    %11 = arith.addf %9, %10 : vector<2x16x1xf32>
    %12 = tpu.reciprocal %11 {approx = true} : vector<2x16x1xf32> -> vector<2x16x1xf32>
    %c0_9 = arith.constant 0 : index
    %c0_10 = arith.constant 0 : index
    %c0_11 = arith.constant 0 : index
    %13 = vector.load %arg2[%c0_9, %c0_10, %c0_11] : memref<2x16x1xf32, #tpu.memory_space<vmem>>, vector<2x16x1xf32>
    %14 = vector.broadcast %13 : vector<2x16x1xf32> to vector<2x16x128xf32>
    %15 = arith.mulf %5, %14 : vector<2x16x128xf32>
    %16 = vector.shape_cast %15 : vector<2x16x128xf32> to vector<32x128xf32>
    %17 = arith.truncf %16 : vector<32x128xf32> to vector<32x128xbf16>
    %c0_12 = arith.constant 0 : index
    %c0_13 = arith.constant 0 : index
    %18 = vector.load %arg8[%c0_12, %c0_13] : memref<128x128xbf16, #tpu.memory_space<vmem>>, vector<128x128xbf16>
    %cst_14 = arith.constant dense<0.000000e+00> : vector<32x128xf32>
    %19 = tpu.matmul %17, %18, %cst_14 {dimension_numbers = #tpu.dot_dimension_numbers<[1], [0], [0], [1], [0, 0, 1, 1], [], []>} : vector<32x128xbf16>, vector<128x128xbf16>, vector<32x128xf32> -> vector<32x128xf32>
    %20 = vector.shape_cast %19 : vector<32x128xf32> to vector<2x16x128xf32>
    %21 = arith.truncf %20 : vector<2x16x128xf32> to vector<2x16x128xbf16>
    "tpu.trace_start"() <{level = 10 : i32, message = "bij,bjd->bid"}> : () -> ()
    %cst_15 = arith.constant dense<0.000000e+00> : vector<2x16x128xf32>
    %22 = tpu.matmul %7, %21, %cst_15 {dimension_numbers = #tpu.dot_dimension_numbers<[2], [1], [1], [2], [0, 0, 0, 1, 1, 2], [0], [0]>} : vector<2x16x16xbf16>, vector<2x16x128xbf16>, vector<2x16x128xf32> -> vector<2x16x128xf32>
    "tpu.trace_stop"() : () -> ()
    %23 = vector.broadcast %12 : vector<2x16x1xf32> to vector<2x16x128xf32>
    %24 = arith.mulf %22, %23 : vector<2x16x128xf32>
    %c0_16 = arith.constant 0 : index
    %c0_17 = arith.constant 0 : index
    %25 = vector.load %arg9[%c0_16, %c0_17] : memref<1x128xf32, #tpu.memory_space<vmem>>, vector<1x128xf32>
    %26 = vector.shape_cast %25 : vector<1x128xf32> to vector<1x1x128xf32>
    %27 = vector.broadcast %26 : vector<1x1x128xf32> to vector<2x16x128xf32>
    %28 = arith.addf %24, %27 : vector<2x16x128xf32>
    %cst_18 = arith.constant 0.000000e+00 : f32
    %29 = vector.broadcast %cst_18 : f32 to vector<2x16x128xf32>
    %30 = arith.maximumf %28, %29 : vector<2x16x128xf32>
    %31 = vector.shape_cast %30 : vector<2x16x128xf32> to vector<32x128xf32>
    %32 = arith.truncf %31 : vector<32x128xf32> to vector<32x128xbf16>
    %c0_19 = arith.constant 0 : index
    %c0_20 = arith.constant 0 : index
    %33 = vector.load %arg10[%c0_19, %c0_20] : memref<128x128xbf16, #tpu.memory_space<vmem>>, vector<128x128xbf16>
    %cst_21 = arith.constant dense<0.000000e+00> : vector<32x128xf32>
    %34 = tpu.matmul %32, %33, %cst_21 {dimension_numbers = #tpu.dot_dimension_numbers<[1], [0], [0], [1], [0, 0, 1, 1], [], []>} : vector<32x128xbf16>, vector<128x128xbf16>, vector<32x128xf32> -> vector<32x128xf32>
    %35 = vector.shape_cast %34 : vector<32x128xf32> to vector<2x16x128xf32>
    %36 = arith.truncf %35 : vector<2x16x128xf32> to vector<2x16x128xbf16>
    "tpu.trace_start"() <{level = 10 : i32, message = "bij,bjd->bid"}> : () -> ()
    %cst_22 = arith.constant dense<0.000000e+00> : vector<2x16x128xf32>
    %37 = tpu.matmul %7, %36, %cst_22 {dimension_numbers = #tpu.dot_dimension_numbers<[2], [1], [1], [2], [0, 0, 0, 1, 1, 2], [0], [0]>} : vector<2x16x16xbf16>, vector<2x16x128xbf16>, vector<2x16x128xf32> -> vector<2x16x128xf32>
    "tpu.trace_stop"() : () -> ()
    %38 = vector.broadcast %12 : vector<2x16x1xf32> to vector<2x16x128xf32>
    %39 = arith.mulf %37, %38 : vector<2x16x128xf32>
    %c0_23 = arith.constant 0 : index
    %c0_24 = arith.constant 0 : index
    %40 = vector.load %arg11[%c0_23, %c0_24] : memref<1x128xf32, #tpu.memory_space<vmem>>, vector<1x128xf32>
    %41 = vector.shape_cast %40 : vector<1x128xf32> to vector<1x1x128xf32>
    %42 = vector.broadcast %41 : vector<1x1x128xf32> to vector<2x16x128xf32>
    %43 = arith.addf %39, %42 : vector<2x16x128xf32>
    %cst_25 = arith.constant 0.000000e+00 : f32
    %44 = vector.broadcast %cst_25 : f32 to vector<2x16x128xf32>
    %45 = arith.maximumf %43, %44 : vector<2x16x128xf32>
    %c0_26 = arith.constant 0 : index
    %c0_27 = arith.constant 0 : index
    %c0_28 = arith.constant 0 : index
    %46 = vector.load %arg14[%c0_26, %c0_27, %c0_28] : memref<2x16x128xf32, #tpu.memory_space<vmem>>, vector<2x16x128xf32>
    tpu.vector_store %arg14[%c0_26, %c0_27, %c0_28], %45 {strides = array<i32>} : memref<2x16x128xf32, #tpu.memory_space<vmem>>, vector<2x16x128xf32>,
    %c0_29 = arith.constant 0 : index
    %c0_30 = arith.constant 0 : index
    %c0_31 = arith.constant 0 : index
    %47 = vector.load %arg4[%c0_29, %c0_30, %c0_31] : memref<2x16x1xf32, #tpu.memory_space<vmem>>, vector<2x16x1xf32>
    %48 = vector.broadcast %47 : vector<2x16x1xf32> to vector<2x16x128xf32>
    %49 = arith.mulf %48, %45 : vector<2x16x128xf32>
    %cst_32 = arith.constant dense<0.000000e+00> : vector<2x128xf32>
    %50 = vector.multi_reduction <add>, %49, %cst_32 [1] : vector<2x16x128xf32> to vector<2x128xf32>
    %c0_33 = arith.constant 0 : index
    %c0_34 = arith.constant 0 : index
    %c0_35 = arith.constant 0 : index
    %51 = vector.load %arg6[%c0_33, %c0_34, %c0_35] : memref<2x1x128xf32, #tpu.memory_space<vmem>>, vector<2x1x128xf32>
    %52 = vector.shape_cast %51 : vector<2x1x128xf32> to vector<2x128xf32>
    %53 = arith.addf %50, %52 : vector<2x128xf32>
    %54 = vector.shape_cast %53 : vector<2x128xf32> to vector<2x1x128xf32>
    %55 = vector.broadcast %54 : vector<2x1x128xf32> to vector<2x16x128xf32>
    %56 = arith.mulf %55, %5 : vector<2x16x128xf32>
    %cst_36 = arith.constant dense<0.000000e+00> : vector<2x16xf32>
    %57 = vector.multi_reduction <add>, %56, %cst_36 [2] : vector<2x16x128xf32> to vector<2x16xf32>
    %c0_37 = arith.constant 0 : index
    %c0_38 = arith.constant 0 : index
    %c0_39 = arith.constant 0 : index
    %58 = vector.load %arg5[%c0_37, %c0_38, %c0_39] : memref<2x1x16xf32, #tpu.memory_space<vmem>>, vector<2x1x16xf32>
    %59 = vector.shape_cast %58 : vector<2x1x16xf32> to vector<2x16xf32>
    %cst_40 = arith.constant -6.000000e+00 : f32
    %60 = vector.broadcast %cst_40 : f32 to vector<2x16xf32>
    %61 = arith.cmpf ogt, %59, %60 : vector<2x16xf32>
    %cst_41 = arith.constant -1.000000e+09 : f32
    %62 = vector.broadcast %cst_41 : f32 to vector<2x16xf32>
    %63 = arith.select %61, %57, %62 : vector<2x16xi1>, vector<2x16xf32>
    %cst_42 = arith.constant dense<0xFF800000> : vector<2xf32>
    %64 = vector.multi_reduction <maximumf>, %63, %cst_42 [1] : vector<2x16xf32> to vector<2xf32>
    %65 = vector.shape_cast %64 : vector<2xf32> to vector<2x1xf32>
    %66 = vector.broadcast %65 : vector<2x1xf32> to vector<2x16xf32>
    %67 = arith.subf %63, %66 : vector<2x16xf32>
    %68 = math.exp %67 : vector<2x16xf32>
    %cst_43 = arith.constant dense<0.000000e+00> : vector<2xf32>
    %69 = vector.multi_reduction <add>, %68, %cst_43 [1] : vector<2x16xf32> to vector<2xf32>
    %70 = vector.shape_cast %69 : vector<2xf32> to vector<2x1xf32>
    %71 = vector.broadcast %70 : vector<2x1xf32> to vector<2x16xf32>
    %72 = arith.divf %68, %71 : vector<2x16xf32>
    %73 = vector.shape_cast %72 : vector<2x16xf32> to vector<2x16x1xf32>
    %74 = vector.broadcast %73 : vector<2x16x1xf32> to vector<2x16x128xf32>
    %75 = arith.mulf %74, %5 : vector<2x16x128xf32>
    %cst_44 = arith.constant dense<0.000000e+00> : vector<2x128xf32>
    %76 = vector.multi_reduction <add>, %75, %cst_44 [1] : vector<2x16x128xf32> to vector<2x128xf32>
    %77 = arith.truncf %76 : vector<2x128xf32> to vector<2x128xbf16>
    %c0_45 = arith.constant 0 : index
    %c0_46 = arith.constant 0 : index
    %78 = vector.load %arg12[%c0_45, %c0_46] : memref<128x128xbf16, #tpu.memory_space<vmem>>, vector<128x128xbf16>
    %cst_47 = arith.constant dense<0.000000e+00> : vector<2x128xf32>
    %79 = tpu.matmul %77, %78, %cst_47 {dimension_numbers = #tpu.dot_dimension_numbers<[1], [0], [0], [1], [0, 0, 1, 1], [], []>} : vector<2x128xbf16>, vector<128x128xbf16>, vector<2x128xf32> -> vector<2x128xf32>
    %c0_48 = arith.constant 0 : index
    %c0_49 = arith.constant 0 : index
    %80 = vector.load %arg13[%c0_48, %c0_49] : memref<1x128xf32, #tpu.memory_space<vmem>>, vector<1x128xf32>
    %81 = vector.broadcast %80 : vector<1x128xf32> to vector<2x128xf32>
    %82 = arith.addf %79, %81 : vector<2x128xf32>
    %83 = vector.shape_cast %82 : vector<2x128xf32> to vector<2x1x128xf32>
    %c0_50 = arith.constant 0 : index
    %c0_51 = arith.constant 0 : index
    %c0_52 = arith.constant 0 : index
    %84 = vector.load %arg15[%c0_50, %c0_51, %c0_52] : memref<2x1x128xf32, #tpu.memory_space<vmem>>, vector<2x1x128xf32>
    tpu.vector_store %arg15[%c0_50, %c0_51, %c0_52], %83 {strides = array<i32>} : memref<2x1x128xf32, #tpu.memory_space<vmem>>, vector<2x1x128xf32>,
    %85 = vector.shape_cast %72 : vector<2x16xf32> to vector<2x1x16xf32>
    %c0_53 = arith.constant 0 : index
    %c0_54 = arith.constant 0 : index
    %c0_55 = arith.constant 0 : index
    %86 = vector.load %arg16[%c0_53, %c0_54, %c0_55] : memref<2x1x128xf32, #tpu.memory_space<vmem>>, vector<2x1x16xf32>
    tpu.vector_store %arg16[%c0_53, %c0_54, %c0_55], %85 {strides = array<i32>} : memref<2x1x128xf32, #tpu.memory_space<vmem>>, vector<2x1x16xf32>,
    %cst_56 = arith.constant 0.000000e+00 : f32
    %87 = vector.broadcast %cst_56 : f32 to vector<2x1x112xf32>
    %c0_57 = arith.constant 0 : index
    %c0_58 = arith.constant 0 : index
    %c16 = arith.constant 16 : index
    %88 = vector.load %arg16[%c0_57, %c0_58, %c16] : memref<2x1x128xf32, #tpu.memory_space<vmem>>, vector<2x1x112xf32>
    tpu.vector_store %arg16[%c0_57, %c0_58, %c16], %87 {strides = array<i32>} : memref<2x1x128xf32, #tpu.memory_space<vmem>>, vector<2x1x112xf32>,
    return
  }
  func.func @transform_0(%arg0: i32) -> (i32, i32, i32) {
    %c0_i32 = arith.constant 0 : i32
    %c0_i32_0 = arith.constant 0 : i32
    %c0_i32_1 = arith.constant 0 : i32
    return %arg0, %c0_i32, %c0_i32_0 : i32, i32, i32
  }
  func.func @transform_1(%arg0: i32) -> (i32, i32, i32) {
    %c0_i32 = arith.constant 0 : i32
    %c0_i32_0 = arith.constant 0 : i32
    %c0_i32_1 = arith.constant 0 : i32
    return %arg0, %c0_i32, %c0_i32_0 : i32, i32, i32
  }
  func.func @transform_2(%arg0: i32) -> (i32, i32, i32) {
    %c0_i32 = arith.constant 0 : i32
    %c0_i32_0 = arith.constant 0 : i32
    %c0_i32_1 = arith.constant 0 : i32
    return %arg0, %c0_i32, %c0_i32_0 : i32, i32, i32
  }
  func.func @transform_3(%arg0: i32) -> (i32, i32, i32) {
    %c0_i32 = arith.constant 0 : i32
    %c0_i32_0 = arith.constant 0 : i32
    %c0_i32_1 = arith.constant 0 : i32
    return %arg0, %c0_i32, %c0_i32_0 : i32, i32, i32
  }
  func.func @transform_4(%arg0: i32) -> (i32, i32, i32) {
    %c0_i32 = arith.constant 0 : i32
    %c0_i32_0 = arith.constant 0 : i32
    %c0_i32_1 = arith.constant 0 : i32
    return %arg0, %c0_i32, %c0_i32_0 : i32, i32, i32
  }
  func.func @transform_5(%arg0: i32) -> (i32, i32, i32) {
    %c0_i32 = arith.constant 0 : i32
    %c0_i32_0 = arith.constant 0 : i32
    %c0_i32_1 = arith.constant 0 : i32
    return %arg0, %c0_i32, %c0_i32_0 : i32, i32, i32
  }
  func.func @transform_6(%arg0: i32) -> (i32, i32) {
    %c0_i32 = arith.constant 0 : i32
    %c0_i32_0 = arith.constant 0 : i32
    %c0_i32_1 = arith.constant 0 : i32
    return %c0_i32, %c0_i32_0 : i32, i32
  }
  func.func @transform_7(%arg0: i32) -> (i32, i32) {
    %c0_i32 = arith.constant 0 : i32
    %c0_i32_0 = arith.constant 0 : i32
    %c0_i32_1 = arith.constant 0 : i32
    return %c0_i32, %c0_i32_0 : i32, i32
  }
  func.func @transform_8(%arg0: i32) -> (i32, i32) {
    %c0_i32 = arith.constant 0 : i32
    %c0_i32_0 = arith.constant 0 : i32
    %c0_i32_1 = arith.constant 0 : i32
    return %c0_i32, %c0_i32_0 : i32, i32
  }
  func.func @transform_9(%arg0: i32) -> (i32, i32) {
    %c0_i32 = arith.constant 0 : i32
    %c0_i32_0 = arith.constant 0 : i32
    %c0_i32_1 = arith.constant 0 : i32
    return %c0_i32, %c0_i32_0 : i32, i32
  }
  func.func @transform_10(%arg0: i32) -> (i32, i32) {
    %c0_i32 = arith.constant 0 : i32
    %c0_i32_0 = arith.constant 0 : i32
    %c0_i32_1 = arith.constant 0 : i32
    return %c0_i32, %c0_i32_0 : i32, i32
  }
  func.func @transform_11(%arg0: i32) -> (i32, i32) {
    %c0_i32 = arith.constant 0 : i32
    %c0_i32_0 = arith.constant 0 : i32
    %c0_i32_1 = arith.constant 0 : i32
    return %c0_i32, %c0_i32_0 : i32, i32
  }
  func.func @transform_12(%arg0: i32) -> (i32, i32) {
    %c0_i32 = arith.constant 0 : i32
    %c0_i32_0 = arith.constant 0 : i32
    %c0_i32_1 = arith.constant 0 : i32
    return %c0_i32, %c0_i32_0 : i32, i32
  }
  func.func @transform_13(%arg0: i32) -> (i32, i32, i32) {
    %c0_i32 = arith.constant 0 : i32
    %c0_i32_0 = arith.constant 0 : i32
    %c0_i32_1 = arith.constant 0 : i32
    return %arg0, %c0_i32, %c0_i32_0 : i32, i32, i32
  }
  func.func @transform_14(%arg0: i32) -> (i32, i32, i32) {
    %c0_i32 = arith.constant 0 : i32
    %c0_i32_0 = arith.constant 0 : i32
    %c0_i32_1 = arith.constant 0 : i32
    return %arg0, %c0_i32, %c0_i32_0 : i32, i32, i32
  }
  func.func @transform_15(%arg0: i32) -> (i32, i32, i32) {
    %c0_i32 = arith.constant 0 : i32
    %c0_i32_0 = arith.constant 0 : i32
    %c0_i32_1 = arith.constant 0 : i32
    return %arg0, %c0_i32, %c0_i32_0 : i32, i32, i32
  }
}

</mosaic_0001>

<llo_original>
// kernel: depgcn_v2_forward.1
$region0: #{depgcn_v2_forward.1}
  #allocation0 [shape = 'u32[]', space=smem, size = 0x4, offset = 0x4, fixed_abs, tag = 'smem constant byte address 0x4 - core index']
  #allocation1 [shape = 'u32[144,128]{1,0:T(1,128)}', space=vmem, size = 0x12000, scoped, tag = 'internal scratch']
  %s0 = inlined_call_operand.vmem [shape: f32[2,16,128], index: 0, kind: input, shape index: {}]
  %s1 = inlined_call_operand.vmem [shape: f32[2,16,1], index: 1, kind: input, shape index: {}]
  %s2 = inlined_call_operand.vmem [shape: f32[2,16,16], index: 2, kind: input, shape index: {}]
  %s3 = inlined_call_operand.vmem [shape: f32[2,16,1], index: 3, kind: input, shape index: {}]
  %s4 = inlined_call_operand.vmem [shape: f32[2,1,16], index: 4, kind: input, shape index: {}]
  %s5 = inlined_call_operand.vmem [shape: f32[2,1,128], index: 5, kind: input, shape index: {}]
  %s6 = inlined_call_operand.vmem [shape: bf16[128,128], index: 6, kind: input, shape index: {}]
  %s7 = inlined_call_operand.vmem [shape: bf16[128,128], index: 7, kind: input, shape index: {}]
  %s8 = inlined_call_operand.vmem [shape: f32[1,128], index: 8, kind: input, shape index: {}]
  %s9 = inlined_call_operand.vmem [shape: bf16[128,128], index: 9, kind: input, shape index: {}]
  %s10 = inlined_call_operand.vmem [shape: f32[1,128], index: 10, kind: input, shape index: {}]
  %s11 = inlined_call_operand.vmem [shape: bf16[128,128], index: 11, kind: input, shape index: {}]
  %s12 = inlined_call_operand.vmem [shape: f32[1,128], index: 12, kind: input, shape index: {}]
  %s13 = inlined_call_operand.hbm [shape: f32[2,16,128], index: 13, kind: output, shape index: {0}]
  %s14 = inlined_call_operand.hbm [shape: f32[2,1,128], index: 14, kind: output, shape index: {1}]
  %s15 = inlined_call_operand.hbm [shape: f32[2,1,128], index: 15, kind: output, shape index: {2}]
  %16 = xla_tuple %s13, %s14, %s15
  %s17 = sld [smem:[#allocation0]]
  $region78: #{depgcn_v2_forward.1} parent=0
    _
  %s19 = ssub.s32 1, %s17
  %s20 = scalar_select 0, %s19, %s17
  $region1: #{depgcn_v2_forward.1} parent=0
    #allocation2 [shape = 'u8[16384]{0}', space=vmem, size = 0x4000, scoped, tag = 'output window, operand 0, single buffered']
    #allocation3 [shape = 's32[1]{0}', space=sflag, size = 0x4, scoped, tag = 'scoped memory for depgcn_v2_forward.1']
    #allocation4 [shape = 'u8[1024]{0}', space=vmem, size = 0x400, scoped, tag = 'output window, operand 1, single buffered']
    #allocation5 [shape = 's32[1]{0}', space=sflag, size = 0x4, scoped, tag = 'scoped memory for depgcn_v2_forward.1']
    #allocation6 [shape = 'u8[1024]{0}', space=vmem, size = 0x400, scoped, tag = 'output window, operand 2, single buffered']
    %21 = vsyncpa [#allocation3], 0
    %22 = vsyncpa [#allocation5], 0
    // Predicated region
    $region2: #{depgcn_v2_forward.1} parent=1 // pred_check
      _
    $region3: #{depgcn_v2_forward.1} parent=1 // pred_check_branch
      %24 = sbr.rel (0) target = $region5
    $region4: #{depgcn_v2_forward.1} parent=1 // pred_region
      _
    $region5: #{depgcn_v2_forward.1} parent=1 // pred_fallthru
      _
    // Predicated region
    $region6: #{depgcn_v2_forward.1} parent=1 // pred_check
      _
    $region7: #{depgcn_v2_forward.1} parent=1 // pred_check_branch
      %26 = sbr.rel (0) target = $region9
    $region8: #{depgcn_v2_forward.1} parent=1 // pred_region
      _
    $region9: #{depgcn_v2_forward.1} parent=1 // pred_fallthru
      _
    // Predicated region
    $region10: #{depgcn_v2_forward.1} parent=1 // pred_check
      _
    $region11: #{depgcn_v2_forward.1} parent=1 // pred_check_branch
      %28 = sbr.rel (0) target = $region13
    $region12: #{depgcn_v2_forward.1} parent=1 // pred_region
      _
    $region13: #{depgcn_v2_forward.1} parent=1 // pred_fallthru
      _
    // Predicated region
    $region14: #{depgcn_v2_forward.1} parent=1 // pred_check
      _
    $region15: #{depgcn_v2_forward.1} parent=1 // pred_check_branch
      %30 = sbr.rel (0) target = $region17
    $region16: #{depgcn_v2_forward.1} parent=1 // pred_region
      _
    $region17: #{depgcn_v2_forward.1} parent=1 // pred_fallthru
      _
    // Predicated region
    $region18: #{depgcn_v2_forward.1} parent=1 // pred_check
      _
    $region19: #{depgcn_v2_forward.1} parent=1 // pred_check_branch
      %32 = sbr.rel (0) target = $region21
    $region20: #{depgcn_v2_forward.1} parent=1 // pred_region
      _
    $region21: #{depgcn_v2_forward.1} parent=1 // pred_fallthru
      _
    // Predicated region
    $region22: #{depgcn_v2_forward.1} parent=1 // pred_check
      _
    $region23: #{depgcn_v2_forward.1} parent=1 // pred_check_branch
      %34 = sbr.rel (0) target = $region25
    $region24: #{depgcn_v2_forward.1} parent=1 // pred_region
      _
    $region25: #{depgcn_v2_forward.1} parent=1 // pred_fallthru
      _
    // Predicated region
    $region26: #{depgcn_v2_forward.1} parent=1 // pred_check
      _
    $region27: #{depgcn_v2_forward.1} parent=1 // pred_check_branch
      %36 = sbr.rel (0) target = $region29
    $region28: #{depgcn_v2_forward.1} parent=1 // pred_region
      _
    $region29: #{depgcn_v2_forward.1} parent=1 // pred_fallthru
      _
    // Predicated region
    $region30: #{depgcn_v2_forward.1} parent=1 // pred_check
      _
    $region31: #{depgcn_v2_forward.1} parent=1 // pred_check_branch
      %38 = sbr.rel (0) target = $region33
    $region32: #{depgcn_v2_forward.1} parent=1 // pred_region
      _
    $region33: #{depgcn_v2_forward.1} parent=1 // pred_fallthru
      _
    // Predicated region
    $region34: #{depgcn_v2_forward.1} parent=1 // pred_check
      _
    $region35: #{depgcn_v2_forward.1} parent=1 // pred_check_branch
      %40 = sbr.rel (0) target = $region37
    $region36: #{depgcn_v2_forward.1} parent=1 // pred_region
      _
    $region37: #{depgcn_v2_forward.1} parent=1 // pred_fallthru
      _
    // Predicated region
    $region38: #{depgcn_v2_forward.1} parent=1 // pred_check
      _
    $region39: #{depgcn_v2_forward.1} parent=1 // pred_check_branch
      %42 = sbr.rel (0) target = $region41
    $region40: #{depgcn_v2_forward.1} parent=1 // pred_region
      _
    $region41: #{depgcn_v2_forward.1} parent=1 // pred_fallthru
      _
    // Predicated region
    $region42: #{depgcn_v2_forward.1} parent=1 // pred_check
      _
    $region43: #{depgcn_v2_forward.1} parent=1 // pred_check_branch
      %44 = sbr.rel (0) target = $region45
    $region44: #{depgcn_v2_forward.1} parent=1 // pred_region
      _
    $region45: #{depgcn_v2_forward.1} parent=1 // pred_fallthru
      _
    // Predicated region
    $region46: #{depgcn_v2_forward.1} parent=1 // pred_check
      _
    $region47: #{depgcn_v2_forward.1} parent=1 // pred_check_branch
      %46 = sbr.rel (0) target = $region49
    $region48: #{depgcn_v2_forward.1} parent=1 // pred_region
      _
    $region49: #{depgcn_v2_forward.1} parent=1 // pred_fallthru
      _
    // Predicated region
    $region50: #{depgcn_v2_forward.1} parent=1 // pred_check
      _
    $region51: #{depgcn_v2_forward.1} parent=1 // pred_check_branch
      %48 = sbr.rel (0) target = $region53
    $region52: #{depgcn_v2_forward.1} parent=1 // pred_region
      _
    $region53: #{depgcn_v2_forward.1} parent=1 // pred_fallthru
      _
    %v50 = vld [vmem:[%s0] sm:$0xff]
    %v51 = vld [vmem:[%s0 + $0x8] sm:$0xff]
    %v52 = vld [vmem:[%s0 + $0x10] sm:$0xff]
    %v53 = vld [vmem:[%s0 + $0x18] sm:$0xff]
    %v54 = vpack.c.bf16 %v51, %v50
    %v55 = vpack.c.bf16 %v53, %v52
    %v56 = vld [vmem:[%s6] sm:$0xf]
    %v57 = vld [vmem:[%s6 + $0x4] sm:$0xf]
    %v58 = vld [vmem:[%s6 + $0x8] sm:$0xf]
    %v59 = vld [vmem:[%s6 + $0xc] sm:$0xf]
    %v60 = vld [vmem:[%s6 + $0x10] sm:$0xf]
    %v61 = vld [vmem:[%s6 + $0x14] sm:$0xf]
    %v62 = vld [vmem:[%s6 + $0x18] sm:$0xf]
    %v63 = vld [vmem:[%s6 + $0x1c] sm:$0xf]
    %v64 = vld [vmem:[%s6 + $0x20] sm:$0xf]
    %v65 = vld [vmem:[%s6 + $0x24] sm:$0xf]
    %v66 = vld [vmem:[%s6 + $0x28] sm:$0xf]
    %v67 = vld [vmem:[%s6 + $0x2c] sm:$0xf]
    %v68 = vld [vmem:[%s6 + $0x30] sm:$0xf]
    %v69 = vld [vmem:[%s6 + $0x34] sm:$0xf]
    %v70 = vld [vmem:[%s6 + $0x38] sm:$0xf]
    %v71 = vld [vmem:[%s6 + $0x3c] sm:$0xf]
    %v88 = vunpack.c.l.b16 %v56
    %v89 = vunpack.c.l.b16 %v57
    %v90 = vunpack.c.l.b16 %v58
    %v91 = vunpack.c.l.b16 %v59
    %v92 = vunpack.c.l.b16 %v60
    %v93 = vunpack.c.l.b16 %v61
    %v94 = vunpack.c.l.b16 %v62
    %v95 = vunpack.c.l.b16 %v63
    %v96 = vunpack.c.l.b16 %v64
    %v97 = vunpack.c.l.b16 %v65
    %v98 = vunpack.c.l.b16 %v66
    %v99 = vunpack.c.l.b16 %v67
    %v100 = vunpack.c.l.b16 %v68
    %v101 = vunpack.c.l.b16 %v69
    %v102 = vunpack.c.l.b16 %v70
    %v103 = vunpack.c.l.b16 %v71
    %v104 = vpack.c.b16 %v89, %v88
    %v105 = vpack.c.b16 %v91, %v90
    %v106 = vpack.c.b16 %v93, %v92
    %v107 = vpack.c.b16 %v95, %v94
    %v108 = vpack.c.b16 %v97, %v96
    %v109 = vpack.c.b16 %v99, %v98
    %v110 = vpack.c.b16 %v101, %v100
    %v111 = vpack.c.b16 %v103, %v102
    %120 = vmatprep.subr.bf16.mxu0 0
    %121 = vmatpush1.bf16.msra.mxu0 %v104
    %122 = vmatprep.subr.bf16.mxu0 0
    %123 = vmatpush1.bf16.msra.mxu0 %v105
    %124 = vmatprep.subr.bf16.mxu0 0
    %125 = vmatpush1.bf16.msra.mxu0 %v106
    %126 = vmatprep.subr.bf16.mxu0 0
    %127 = vmatpush1.bf16.msra.mxu0 %v107
    %128 = vmatprep.subr.bf16.mxu0 0
    %129 = vmatpush1.bf16.msra.mxu0 %v108
    %130 = vmatprep.subr.bf16.mxu0 0
    %131 = vmatpush1.bf16.msra.mxu0 %v109
    %132 = vmatprep.subr.bf16.mxu0 0
    %133 = vmatpush1.bf16.msra.mxu0 %v110
    %134 = vmatprep.subr.bf16.mxu0 0
    %135 = vmatpush1.bf16.msra.mxu0 %v111
    %136 = vmatprep.subr.bf16.mxu0 0
    %137 = vmatpush1.bf16.msra.mxu0 0
    %138 = vmatprep.subr.bf16.mxu0 0
    %139 = vmatpush1.bf16.msra.mxu0 0
    %140 = vmatprep.subr.bf16.mxu0 0
    %141 = vmatpush1.bf16.msra.mxu0 0
    %142 = vmatprep.subr.bf16.mxu0 0
    %143 = vmatpush1.bf16.msra.mxu0 0
    %144 = vmatprep.subr.bf16.mxu0 0
    %145 = vmatpush1.bf16.msra.mxu0 0
    %146 = vmatprep.subr.bf16.mxu0 0
    %147 = vmatpush1.bf16.msra.mxu0 0
    %148 = vmatprep.subr.bf16.mxu0 0
    %149 = vmatpush1.bf16.msra.mxu0 0
    %150 = vmatprep.subr.bf16.mxu0 0
    %151 = vmatpush1.bf16.msra.mxu0 0
    %152 = vmatprep.mubr.bf16.mxu0 0
    %153 = vmatmul.mubr.bf16.gmra.mrb[0].mxu0 %v54
    %v154 = vpop.f32.mrb[0].mxu0
    %v155 = vadd.f32 0.0, %v154
    %v156 = vpop.f32.mrb[0].mxu0
    %v157 = vpop.f32.mrb[0].mxu0
    %v158 = vadd.f32 0.0, %v157
    %v159 = vpop.f32.mrb[0].mxu0
    %160 = vmatprep.mubr.bf16.mxu0 0
    %161 = vmatmul.mubr.bf16.gmra.mrb[0].mxu0 %v55
    %v162 = vpop.f32.mrb[0].mxu0
    %v163 = vadd.f32 0.0, %v162
    %v164 = vpop.f32.mrb[0].mxu0
    %v165 = vpop.f32.mrb[0].mxu0
    %v166 = vadd.f32 0.0, %v165
    %v167 = vpop.f32.mrb[0].mxu0
    %168 = vdwg.mxu0
    %v169 = vld [vmem:[%s2] sm:$0xff]
    %v170 = vld [vmem:[%s2 + $0x8] sm:$0xff]
    %v171 = vld [vmem:[%s2 + $0x10] sm:$0xff]
    %v172 = vld [vmem:[%s2 + $0x18] sm:$0xff]
    %v173 = vpack.c.bf16 %v170, %v169
    %v174 = vpack.c.bf16 %v172, %v171
    %vm175 = vcmask 130048
    %v176 = vsel %vm175, %v169, 0.0
    %177 = vadd.xlane.f32.xlu0 %v176
    %v178 = vpop.xlane.xlu0 %177
    %v179 = vsel %vm175, %v170, 0.0
    %180 = vadd.xlane.f32.xlu0 %v179
    %v181 = vpop.xlane.xlu0 %180
    %v182 = vsel %vm175, %v171, 0.0
    %183 = vadd.xlane.f32.xlu0 %v182
    %v184 = vpop.xlane.xlu0 %183
    %v185 = vsel %vm175, %v172, 0.0
    %186 = vadd.xlane.f32.xlu0 %v185
    %v187 = vpop.xlane.xlu0 %186
    %v188 = vadd.f32 %v178, 1.0
    %v189 = vadd.f32 %v181, 1.0
    %v190 = vadd.f32 %v184, 1.0
    %v191 = vadd.f32 %v187, 1.0
    %v192 = vrcp.pop %v188
    %v193 = vrcp.pop %v189
    %v194 = vrcp.pop %v190
    %v195 = vrcp.pop %v191
    %v196 = vld [vmem:[%s1] sm:$0xff]
    %v197 = vld [vmem:[%s1 + $0x8] sm:$0xff]
    %v198 = vld [vmem:[%s1 + $0x10] sm:$0xff]
    %v199 = vld [vmem:[%s1 + $0x18] sm:$0xff]
    %201 = vset.pattern.permute.xlu0 0
    %202 = vperm.xlu0 %201, %v196
    %v203 = vpop.permute.xlu0 %202
    %206 = vset.pattern.permute.xlu0 0
    %207 = vperm.xlu0 %206, %v197
    %v208 = vpop.permute.xlu0 %207
    %211 = vset.pattern.permute.xlu0 0
    %212 = vperm.xlu0 %211, %v198
    %v213 = vpop.permute.xlu0 %212
    %216 = vset.pattern.permute.xlu0 0
    %217 = vperm.xlu0 %216, %v199
    %v218 = vpop.permute.xlu0 %217
    %v220 = vmul.f32 %v155, %v203
    %v221 = vmul.f32 %v158, %v208
    %v222 = vmul.f32 %v163, %v213
    %v223 = vmul.f32 %v166, %v218
    %v224 = vpack.c.bf16 %v221, %v220
    %v225 = vpack.c.bf16 %v223, %v222
    %v226 = vld [vmem:[%s7] sm:$0xf]
    %v227 = vld [vmem:[%s7 + $0x4] sm:$0xf]
    %v228 = vld [vmem:[%s7 + $0x8] sm:$0xf]
    %v229 = vld [vmem:[%s7 + $0xc] sm:$0xf]
    %v230 = vld [vmem:[%s7 + $0x10] sm:$0xf]
    %v231 = vld [vmem:[%s7 + $0x14] sm:$0xf]
    %v232 = vld [vmem:[%s7 + $0x18] sm:$0xf]
    %v233 = vld [vmem:[%s7 + $0x1c] sm:$0xf]
    %v234 = vld [vmem:[%s7 + $0x20] sm:$0xf]
    %v235 = vld [vmem:[%s7 + $0x24] sm:$0xf]
    %v236 = vld [vmem:[%s7 + $0x28] sm:$0xf]
    %v237 = vld [vmem:[%s7 + $0x2c] sm:$0xf]
    %v238 = vld [vmem:[%s7 + $0x30] sm:$0xf]
    %v239 = vld [vmem:[%s7 + $0x34] sm:$0xf]
    %v240 = vld [vmem:[%s7 + $0x38] sm:$0xf]
    %v241 = vld [vmem:[%s7 + $0x3c] sm:$0xf]
    %v258 = vunpack.c.l.b16 %v226
    %v259 = vunpack.c.l.b16 %v227
    %v260 = vunpack.c.l.b16 %v228
    %v261 = vunpack.c.l.b16 %v229
    %v262 = vunpack.c.l.b16 %v230
    %v263 = vunpack.c.l.b16 %v231
    %v264 = vunpack.c.l.b16 %v232
    %v265 = vunpack.c.l.b16 %v233
    %v266 = vunpack.c.l.b16 %v234
    %v267 = vunpack.c.l.b16 %v235
    %v268 = vunpack.c.l.b16 %v236
    %v269 = vunpack.c.l.b16 %v237
    %v270 = vunpack.c.l.b16 %v238
    %v271 = vunpack.c.l.b16 %v239
    %v272 = vunpack.c.l.b16 %v240
    %v273 = vunpack.c.l.b16 %v241
    %v274 = vpack.c.b16 %v259, %v258
    %v275 = vpack.c.b16 %v261, %v260
    %v276 = vpack.c.b16 %v263, %v262
    %v277 = vpack.c.b16 %v265, %v264
    %v278 = vpack.c.b16 %v267, %v266
    %v279 = vpack.c.b16 %v269, %v268
    %v280 = vpack.c.b16 %v271, %v270
    %v281 = vpack.c.b16 %v273, %v272
    %290 = vmatprep.subr.bf16.mxu0 0
    %291 = vmatpush1.bf16.msra.mxu0 %v274
    %292 = vmatprep.subr.bf16.mxu0 0
    %293 = vmatpush1.bf16.msra.mxu0 %v275
    %294 = vmatprep.subr.bf16.mxu0 0
    %295 = vmatpush1.bf16.msra.mxu0 %v276
    %296 = vmatprep.subr.bf16.mxu0 0
    %297 = vmatpush1.bf16.msra.mxu0 %v277
    %298 = vmatprep.subr.bf16.mxu0 0
    %299 = vmatpush1.bf16.msra.mxu0 %v278
    %300 = vmatprep.subr.bf16.mxu0 0
    %301 = vmatpush1.bf16.msra.mxu0 %v279
    %302 = vmatprep.subr.bf16.mxu0 0
    %303 = vmatpush1.bf16.msra.mxu0 %v280
    %304 = vmatprep.subr.bf16.mxu0 0
    %305 = vmatpush1.bf16.msra.mxu0 %v281
    %306 = vmatprep.subr.bf16.mxu0 0
    %307 = vmatpush1.bf16.msra.mxu0 0
    %308 = vmatprep.subr.bf16.mxu0 0
    %309 = vmatpush1.bf16.msra.mxu0 0
    %310 = vmatprep.subr.bf16.mxu0 0
    %311 = vmatpush1.bf16.msra.mxu0 0
    %312 = vmatprep.subr.bf16.mxu0 0
    %313 = vmatpush1.bf16.msra.mxu0 0
    %314 = vmatprep.subr.bf16.mxu0 0
    %315 = vmatpush1.bf16.msra.mxu0 0
    %316 = vmatprep.subr.bf16.mxu0 0
    %317 = vmatpush1.bf16.msra.mxu0 0
    %318 = vmatprep.subr.bf16.mxu0 0
    %319 = vmatpush1.bf16.msra.mxu0 0
    %320 = vmatprep.subr.bf16.mxu0 0
    %321 = vmatpush1.bf16.msra.mxu0 0
    %322 = vmatprep.mubr.bf16.mxu0 0
    %323 = vmatmul.mubr.bf16.gmra.mrb[0].mxu0 %v224
    %v324 = vpop.f32.mrb[0].mxu0
    %v325 = vadd.f32 0.0, %v324
    %v326 = vpop.f32.mrb[0].mxu0
    %v327 = vpop.f32.mrb[0].mxu0
    %v328 = vadd.f32 0.0, %v327
    %v329 = vpop.f32.mrb[0].mxu0
    %330 = vmatprep.mubr.bf16.mxu0 0
    %331 = vmatmul.mubr.bf16.gmra.mrb[0].mxu0 %v225
    %v332 = vpop.f32.mrb[0].mxu0
    %v333 = vadd.f32 0.0, %v332
    %v334 = vpop.f32.mrb[0].mxu0
    %v335 = vpop.f32.mrb[0].mxu0
    %v336 = vadd.f32 0.0, %v335
    %v337 = vpop.f32.mrb[0].mxu0
    %338 = vdwg.mxu0
    %v339 = vpack.c.bf16 %v328, %v325
    %v340 = vpack.c.bf16 %v336, %v333
    %v342 = vsel %vm175, %v173, 0
    %344 = vmatprep.subr.bf16.mxu0 0
    %345 = vmatpush1.bf16.msra.mxu0 %v339
    %346 = vmatprep.subr.bf16.mxu0 0
    %347 = vmatpush1.bf16.msra.mxu0 0
    %348 = vmatprep.subr.bf16.mxu0 0
    %349 = vmatpush1.bf16.msra.mxu0 0
    %350 = vmatprep.subr.bf16.mxu0 0
    %351 = vmatpush1.bf16.msra.mxu0 0
    %352 = vmatprep.subr.bf16.mxu0 0
    %353 = vmatpush1.bf16.msra.mxu0 0
    %354 = vmatprep.subr.bf16.mxu0 0
    %355 = vmatpush1.bf16.msra.mxu0 0
    %356 = vmatprep.subr.bf16.mxu0 0
    %357 = vmatpush1.bf16.msra.mxu0 0
    %358 = vmatprep.subr.bf16.mxu0 0
    %359 = vmatpush1.bf16.msra.mxu0 0
    %360 = vmatprep.subr.bf16.mxu0 0
    %361 = vmatpush1.bf16.msra.mxu0 0
    %362 = vmatprep.subr.bf16.mxu0 0
    %363 = vmatpush1.bf16.msra.mxu0 0
    %364 = vmatprep.subr.bf16.mxu0 0
    %365 = vmatpush1.bf16.msra.mxu0 0
    %366 = vmatprep.subr.bf16.mxu0 0
    %367 = vmatpush1.bf16.msra.mxu0 0
    %368 = vmatprep.subr.bf16.mxu0 0
    %369 = vmatpush1.bf16.msra.mxu0 0
    %370 = vmatprep.subr.bf16.mxu0 0
    %371 = vmatpush1.bf16.msra.mxu0 0
    %372 = vmatprep.subr.bf16.mxu0 0
    %373 = vmatpush1.bf16.msra.mxu0 0
    %374 = vmatprep.subr.bf16.mxu0 0
    %375 = vmatpush1.bf16.msra.mxu0 0
    %376 = vmatprep.mubr.bf16.mxu0 0
    %377 = vmatmul.mubr.bf16.gmra.mrb[0].mxu0 %v342
    %v378 = vpop.f32.mrb[0].mxu0
    %v379 = vadd.f32 0.0, %v378
    %v380 = vpop.f32.mrb[0].mxu0
    %v381 = vpop.f32.mrb[0].mxu0
    %v382 = vadd.f32 0.0, %v381
    %v383 = vpop.f32.mrb[0].mxu0
    %384 = vdwg.mxu0
    %v386 = vsel %vm175, %v174, 0
    %388 = vmatprep.subr.bf16.mxu0 0
    %389 = vmatpush1.bf16.msra.mxu0 %v340
    %390 = vmatprep.subr.bf16.mxu0 0
    %391 = vmatpush1.bf16.msra.mxu0 0
    %392 = vmatprep.subr.bf16.mxu0 0
    %393 = vmatpush1.bf16.msra.mxu0 0
    %394 = vmatprep.subr.bf16.mxu0 0
    %395 = vmatpush1.bf16.msra.mxu0 0
    %396 = vmatprep.subr.bf16.mxu0 0
    %397 = vmatpush1.bf16.msra.mxu0 0
    %398 = vmatprep.subr.bf16.mxu0 0
    %399 = vmatpush1.bf16.msra.mxu0 0
    %400 = vmatprep.subr.bf16.mxu0 0
    %401 = vmatpush1.bf16.msra.mxu0 0
    %402 = vmatprep.subr.bf16.mxu0 0
    %403 = vmatpush1.bf16.msra.mxu0 0
    %404 = vmatprep.subr.bf16.mxu0 0
    %405 = vmatpush1.bf16.msra.mxu0 0
    %406 = vmatprep.subr.bf16.mxu0 0
    %407 = vmatpush1.bf16.msra.mxu0 0
    %408 = vmatprep.subr.bf16.mxu0 0
    %409 = vmatpush1.bf16.msra.mxu0 0
    %410 = vmatprep.subr.bf16.mxu0 0
    %411 = vmatpush1.bf16.msra.mxu0 0
    %412 = vmatprep.subr.bf16.mxu0 0
    %413 = vmatpush1.bf16.msra.mxu0 0
    %414 = vmatprep.subr.bf16.mxu0 0
    %415 = vmatpush1.bf16.msra.mxu0 0
    %416 = vmatprep.subr.bf16.mxu0 0
    %417 = vmatpush1.bf16.msra.mxu0 0
    %418 = vmatprep.subr.bf16.mxu0 0
    %419 = vmatpush1.bf16.msra.mxu0 0
    %420 = vmatprep.mubr.bf16.mxu0 0
    %421 = vmatmul.mubr.bf16.gmra.mrb[0].mxu0 %v386
    %v422 = vpop.f32.mrb[0].mxu0
    %v423 = vadd.f32 0.0, %v422
    %v424 = vpop.f32.mrb[0].mxu0
    %v425 = vpop.f32.mrb[0].mxu0
    %v426 = vadd.f32 0.0, %v425
    %v427 = vpop.f32.mrb[0].mxu0
    %428 = vdwg.mxu0
    %v429 = vmul.f32 %v379, %v192
    %v430 = vmul.f32 %v382, %v193
    %v431 = vmul.f32 %v423, %v194
    %v432 = vmul.f32 %v426, %v195
    %v433 = vld [vmem:[%s8] sm:$0x1]
    %v435 = vlaneseq
    %v436 = vshrl.u32 %v435, 7
    %v437 = vsub.s32 0, %v436
    %v438 = vrot.slane %v433, %v437
    %v440 = vadd.f32 %v429, %v438
    %v441 = vadd.f32 %v430, %v438
    %v442 = vadd.f32 %v431, %v438
    %v443 = vadd.f32 %v432, %v438
    %v444 = vmax.f32 %v440, 0.0
    %v445 = vmax.f32 %v441, 0.0
    %v446 = vmax.f32 %v442, 0.0
    %v447 = vmax.f32 %v443, 0.0
    %v448 = vpack.c.bf16 %v445, %v444
    %v449 = vpack.c.bf16 %v447, %v446
    %v450 = vld [vmem:[%s9] sm:$0xf]
    %v451 = vld [vmem:[%s9 + $0x4] sm:$0xf]
    %v452 = vld [vmem:[%s9 + $0x8] sm:$0xf]
    %v453 = vld [vmem:[%s9 + $0xc] sm:$0xf]
    %v454 = vld [vmem:[%s9 + $0x10] sm:$0xf]
    %v455 = vld [vmem:[%s9 + $0x14] sm:$0xf]
    %v456 = vld [vmem:[%s9 + $0x18] sm:$0xf]
    %v457 = vld [vmem:[%s9 + $0x1c] sm:$0xf]
    %v458 = vld [vmem:[%s9 + $0x20] sm:$0xf]
    %v459 = vld [vmem:[%s9 + $0x24] sm:$0xf]
    %v460 = vld [vmem:[%s9 + $0x28] sm:$0xf]
    %v461 = vld [vmem:[%s9 + $0x2c] sm:$0xf]
    %v462 = vld [vmem:[%s9 + $0x30] sm:$0xf]
    %v463 = vld [vmem:[%s9 + $0x34] sm:$0xf]
    %v464 = vld [vmem:[%s9 + $0x38] sm:$0xf]
    %v465 = vld [vmem:[%s9 + $0x3c] sm:$0xf]
    %v482 = vunpack.c.l.b16 %v450
    %v483 = vunpack.c.l.b16 %v451
    %v484 = vunpack.c.l.b16 %v452
    %v485 = vunpack.c.l.b16 %v453
    %v486 = vunpack.c.l.b16 %v454
    %v487 = vunpack.c.l.b16 %v455
    %v488 = vunpack.c.l.b16 %v456
    %v489 = vunpack.c.l.b16 %v457
    %v490 = vunpack.c.l.b16 %v458
    %v491 = vunpack.c.l.b16 %v459
    %v492 = vunpack.c.l.b16 %v460
    %v493 = vunpack.c.l.b16 %v461
    %v494 = vunpack.c.l.b16 %v462
    %v495 = vunpack.c.l.b16 %v463
    %v496 = vunpack.c.l.b16 %v464
    %v497 = vunpack.c.l.b16 %v465
    %v498 = vpack.c.b16 %v483, %v482
    %v499 = vpack.c.b16 %v485, %v484
    %v500 = vpack.c.b16 %v487, %v486
    %v501 = vpack.c.b16 %v489, %v488
    %v502 = vpack.c.b16 %v491, %v490
    %v503 = vpack.c.b16 %v493, %v492
    %v504 = vpack.c.b16 %v495, %v494
    %v505 = vpack.c.b16 %v497, %v496
    %514 = vmatprep.subr.bf16.mxu0 0
    %515 = vmatpush1.bf16.msra.mxu0 %v498
    %516 = vmatprep.subr.bf16.mxu0 0
    %517 = vmatpush1.bf16.msra.mxu0 %v499
    %518 = vmatprep.subr.bf16.mxu0 0
    %519 = vmatpush1.bf16.msra.mxu0 %v500
    %520 = vmatprep.subr.bf16.mxu0 0
    %521 = vmatpush1.bf16.msra.mxu0 %v501
    %522 = vmatprep.subr.bf16.mxu0 0
    %523 = vmatpush1.bf16.msra.mxu0 %v502
    %524 = vmatprep.subr.bf16.mxu0 0
    %525 = vmatpush1.bf16.msra.mxu0 %v503
    %526 = vmatprep.subr.bf16.mxu0 0
    %527 = vmatpush1.bf16.msra.mxu0 %v504
    %528 = vmatprep.subr.bf16.mxu0 0
    %529 = vmatpush1.bf16.msra.mxu0 %v505
    %530 = vmatprep.subr.bf16.mxu0 0
    %531 = vmatpush1.bf16.msra.mxu0 0
    %532 = vmatprep.subr.bf16.mxu0 0
    %533 = vmatpush1.bf16.msra.mxu0 0
    %534 = vmatprep.subr.bf16.mxu0 0
    %535 = vmatpush1.bf16.msra.mxu0 0
    %536 = vmatprep.subr.bf16.mxu0 0
    %537 = vmatpush1.bf16.msra.mxu0 0
    %538 = vmatprep.subr.bf16.mxu0 0
    %539 = vmatpush1.bf16.msra.mxu0 0
    %540 = vmatprep.subr.bf16.mxu0 0
    %541 = vmatpush1.bf16.msra.mxu0 0
    %542 = vmatprep.subr.bf16.mxu0 0
    %543 = vmatpush1.bf16.msra.mxu0 0
    %544 = vmatprep.subr.bf16.mxu0 0
    %545 = vmatpush1.bf16.msra.mxu0 0
    %546 = vmatprep.mubr.bf16.mxu0 0
    %547 = vmatmul.mubr.bf16.gmra.mrb[0].mxu0 %v448
    %v548 = vpop.f32.mrb[0].mxu0
    %v549 = vadd.f32 0.0, %v548
    %v550 = vpop.f32.mrb[0].mxu0
    %v551 = vpop.f32.mrb[0].mxu0
    %v552 = vadd.f32 0.0, %v551
    %v553 = vpop.f32.mrb[0].mxu0
    %554 = vmatprep.mubr.bf16.mxu0 0
    %555 = vmatmul.mubr.bf16.gmra.mrb[0].mxu0 %v449
    %v556 = vpop.f32.mrb[0].mxu0
    %v557 = vadd.f32 0.0, %v556
    %v558 = vpop.f32.mrb[0].mxu0
    %v559 = vpop.f32.mrb[0].mxu0
    %v560 = vadd.f32 0.0, %v559
    %v561 = vpop.f32.mrb[0].mxu0
    %562 = vdwg.mxu0
    %v563 = vpack.c.bf16 %v552, %v549
    %v564 = vpack.c.bf16 %v560, %v557
    %565 = vmatprep.subr.bf16.mxu0 0
    %566 = vmatpush1.bf16.msra.mxu0 %v563
    %567 = vmatprep.subr.bf16.mxu0 0
    %568 = vmatpush1.bf16.msra.mxu0 0
    %569 = vmatprep.subr.bf16.mxu0 0
    %570 = vmatpush1.bf16.msra.mxu0 0
    %571 = vmatprep.subr.bf16.mxu0 0
    %572 = vmatpush1.bf16.msra.mxu0 0
    %573 = vmatprep.subr.bf16.mxu0 0
    %574 = vmatpush1.bf16.msra.mxu0 0
    %575 = vmatprep.subr.bf16.mxu0 0
    %576 = vmatpush1.bf16.msra.mxu0 0
    %577 = vmatprep.subr.bf16.mxu0 0
    %578 = vmatpush1.bf16.msra.mxu0 0
    %579 = vmatprep.subr.bf16.mxu0 0
    %580 = vmatpush1.bf16.msra.mxu0 0
    %581 = vmatprep.subr.bf16.mxu0 0
    %582 = vmatpush1.bf16.msra.mxu0 0
    %583 = vmatprep.subr.bf16.mxu0 0
    %584 = vmatpush1.bf16.msra.mxu0 0
    %585 = vmatprep.subr.bf16.mxu0 0
    %586 = vmatpush1.bf16.msra.mxu0 0
    %587 = vmatprep.subr.bf16.mxu0 0
    %588 = vmatpush1.bf16.msra.mxu0 0
    %589 = vmatprep.subr.bf16.mxu0 0
    %590 = vmatpush1.bf16.msra.mxu0 0
    %591 = vmatprep.subr.bf16.mxu0 0
    %592 = vmatpush1.bf16.msra.mxu0 0
    %593 = vmatprep.subr.bf16.mxu0 0
    %594 = vmatpush1.bf16.msra.mxu0 0
    %595 = vmatprep.subr.bf16.mxu0 0
    %596 = vmatpush1.bf16.msra.mxu0 0
    %597 = vmatprep.mubr.bf16.mxu0 0
    %598 = vmatmul.mubr.bf16.gmra.mrb[0].mxu0 %v342
    %v599 = vpop.f32.mrb[0].mxu0
    %v600 = vadd.f32 0.0, %v599
    %v601 = vpop.f32.mrb[0].mxu0
    %v602 = vpop.f32.mrb[0].mxu0
    %v603 = vadd.f32 0.0, %v602
    %v604 = vpop.f32.mrb[0].mxu0
    %605 = vdwg.mxu0
    %606 = vmatprep.subr.bf16.mxu0 0
    %607 = vmatpush1.bf16.msra.mxu0 %v564
    %608 = vmatprep.subr.bf16.mxu0 0
    %609 = vmatpush1.bf16.msra.mxu0 0
    %610 = vmatprep.subr.bf16.mxu0 0
    %611 = vmatpush1.bf16.msra.mxu0 0
    %612 = vmatprep.subr.bf16.mxu0 0
    %613 = vmatpush1.bf16.msra.mxu0 0
    %614 = vmatprep.subr.bf16.mxu0 0
    %615 = vmatpush1.bf16.msra.mxu0 0
    %616 = vmatprep.subr.bf16.mxu0 0
    %617 = vmatpush1.bf16.msra.mxu0 0
    %618 = vmatprep.subr.bf16.mxu0 0
    %619 = vmatpush1.bf16.msra.mxu0 0
    %620 = vmatprep.subr.bf16.mxu0 0
    %621 = vmatpush1.bf16.msra.mxu0 0
    %622 = vmatprep.subr.bf16.mxu0 0
    %623 = vmatpush1.bf16.msra.mxu0 0
    %624 = vmatprep.subr.bf16.mxu0 0
    %625 = vmatpush1.bf16.msra.mxu0 0
    %626 = vmatprep.subr.bf16.mxu0 0
    %627 = vmatpush1.bf16.msra.mxu0 0
    %628 = vmatprep.subr.bf16.mxu0 0
    %629 = vmatpush1.bf16.msra.mxu0 0
    %630 = vmatprep.subr.bf16.mxu0 0
    %631 = vmatpush1.bf16.msra.mxu0 0
    %632 = vmatprep.subr.bf16.mxu0 0
    %633 = vmatpush1.bf16.msra.mxu0 0
    %634 = vmatprep.subr.bf16.mxu0 0
    %635 = vmatpush1.bf16.msra.mxu0 0
    %636 = vmatprep.subr.bf16.mxu0 0
    %637 = vmatpush1.bf16.msra.mxu0 0
    %638 = vmatprep.mubr.bf16.mxu0 0
    %639 = vmatmul.mubr.bf16.gmra.mrb[0].mxu0 %v386
    %v640 = vpop.f32.mrb[0].mxu0
    %v641 = vadd.f32 0.0, %v640
    %v642 = vpop.f32.mrb[0].mxu0
    %v643 = vpop.f32.mrb[0].mxu0
    %v644 = vadd.f32 0.0, %v643
    %v645 = vpop.f32.mrb[0].mxu0
    %646 = vdwg.mxu0
    %v647 = vmul.f32 %v600, %v192
    %v648 = vmul.f32 %v603, %v193
    %v649 = vmul.f32 %v641, %v194
    %v650 = vmul.f32 %v644, %v195
    %v651 = vld [vmem:[%s10] sm:$0x1]
    %v653 = vlaneseq
    %v654 = vshrl.u32 %v653, 7
    %v655 = vsub.s32 0, %v654
    %v656 = vrot.slane %v651, %v655
    %v658 = vadd.f32 %v647, %v656
    %v659 = vadd.f32 %v648, %v656
    %v660 = vadd.f32 %v649, %v656
    %v661 = vadd.f32 %v650, %v656
    %v662 = vmax.f32 %v658, 0.0
    %v663 = vmax.f32 %v659, 0.0
    %v664 = vmax.f32 %v660, 0.0
    %v665 = vmax.f32 %v661, 0.0
    %666 = vst [vmem:[#allocation2] sm:$0xff] %v662
    %667 = vst [vmem:[#allocation2 + $0x8] sm:$0xff] %v663
    %668 = vst [vmem:[#allocation2 + $0x10] sm:$0xff] %v664
    %669 = vst [vmem:[#allocation2 + $0x18] sm:$0xff] %v665
    %v670 = vld [vmem:[%s3] sm:$0xff]
    %v671 = vld [vmem:[%s3 + $0x8] sm:$0xff]
    %v672 = vld [vmem:[%s3 + $0x10] sm:$0xff]
    %v673 = vld [vmem:[%s3 + $0x18] sm:$0xff]
    %675 = vset.pattern.permute.xlu0 0
    %676 = vperm.xlu0 %675, %v670
    %v677 = vpop.permute.xlu0 %676
    %680 = vset.pattern.permute.xlu0 0
    %681 = vperm.xlu0 %680, %v671
    %v682 = vpop.permute.xlu0 %681
    %685 = vset.pattern.permute.xlu0 0
    %686 = vperm.xlu0 %685, %v672
    %v687 = vpop.permute.xlu0 %686
    %690 = vset.pattern.permute.xlu0 0
    %691 = vperm.xlu0 %690, %v673
    %v692 = vpop.permute.xlu0 %691
    %v694 = vmul.f32 %v677, %v662
    %v695 = vmul.f32 %v682, %v663
    %v696 = vmul.f32 %v687, %v664
    %v697 = vmul.f32 %v692, %v665
    %v698 = vadd.f32 %v694, %v695
    %v699 = vrot.slane %v698, 4
    %v700 = vadd.f32 %v698, %v699
    %v701 = vrot.slane %v700, 2
    %v702 = vadd.f32 %v700, %v701
    %v703 = vrot.slane %v702, 1
    %v704 = vadd.f32 %v702, %v703
    %v705 = vadd.f32 %v696, %v697
    %v706 = vrot.slane %v705, 4
    %v707 = vadd.f32 %v705, %v706
    %v708 = vrot.slane %v707, 2
    %v709 = vadd.f32 %v707, %v708
    %v710 = vrot.slane %v709, 1
    %v711 = vadd.f32 %v709, %v710
    %v712 = vld [vmem:[%s5] sm:$0x1]
    %v713 = vld [vmem:[%s5 + $0x1] sm:$0x1]
    %v714 = vadd.f32 %v704, %v712
    %v715 = vadd.f32 %v711, %v713
    %v716 = vlaneseq
    %v717 = vshrl.u32 %v716, 7
    %v718 = vsub.s32 0, %v717
    %v719 = vrot.slane %v714, %v718
    %v720 = vlaneseq
    %v721 = vshrl.u32 %v720, 7
    %v722 = vsub.s32 0, %v721
    %v723 = vrot.slane %v715, %v722
    %v724 = vmul.f32 %v719, %v155
    %v725 = vmul.f32 %v719, %v158
    %v726 = vmul.f32 %v723, %v163
    %v727 = vmul.f32 %v723, %v166
    %728 = vadd.xlane.f32.xlu0 %v724
    %v729 = vpop.xlane.xlu0 %728
    %730 = vadd.xlane.f32.xlu0 %v725
    %v731 = vpop.xlane.xlu0 %730
    %732 = vadd.xlane.f32.xlu0 %v726
    %v733 = vpop.xlane.xlu0 %732
    %734 = vadd.xlane.f32.xlu0 %v727
    %v735 = vpop.xlane.xlu0 %734
    %v736 = vld [vmem:[%s4] sm:$0x1]
    %v737 = vld [vmem:[%s4 + $0x1] sm:$0x1]
    %vm738 = vcmp.gt.f32.partialorder %v736, -6.0
    %vm739 = vcmp.gt.f32.partialorder %v737, -6.0
    %v744 = vlaneseq
    %v745 = vshrl.u32 %v744, 7
    %v746 = vsub.s32 0, %v745
    %v747 = vrot.slane %v729, %v746
    %v748 = vlaneseq
    %v749 = vshrl.u32 %v748, 7
    %v750 = vsub.s32 1, %v749
    %v751 = vrot.slane %v729, %v750
    %v752 = vlaneseq
    %v753 = vshrl.u32 %v752, 7
    %v754 = vsub.s32 2, %v753
    %v755 = vrot.slane %v729, %v754
    %v756 = vlaneseq
    %v757 = vshrl.u32 %v756, 7
    %v758 = vsub.s32 3, %v757
    %v759 = vrot.slane %v729, %v758
    %v760 = vlaneseq
    %v761 = vshrl.u32 %v760, 7
    %v762 = vsub.s32 4, %v761
    %v763 = vrot.slane %v729, %v762
    %v764 = vlaneseq
    %v765 = vshrl.u32 %v764, 7
    %v766 = vsub.s32 5, %v765
    %v767 = vrot.slane %v729, %v766
    %v768 = vlaneseq
    %v769 = vshrl.u32 %v768, 7
    %v770 = vsub.s32 6, %v769
    %v771 = vrot.slane %v729, %v770
    %v772 = vlaneseq
    %v773 = vshrl.u32 %v772, 7
    %v774 = vsub.s32 7, %v773
    %v775 = vrot.slane %v729, %v774
    %v776 = vlaneseq
    %v777 = vshrl.u32 %v776, 7
    %v778 = vsub.s32 0, %v777
    %v779 = vrot.slane %v731, %v778
    %v780 = vlaneseq
    %v781 = vshrl.u32 %v780, 7
    %v782 = vsub.s32 1, %v781
    %v783 = vrot.slane %v731, %v782
    %v784 = vlaneseq
    %v785 = vshrl.u32 %v784, 7
    %v786 = vsub.s32 2, %v785
    %v787 = vrot.slane %v731, %v786
    %v788 = vlaneseq
    %v789 = vshrl.u32 %v788, 7
    %v790 = vsub.s32 3, %v789
    %v791 = vrot.slane %v731, %v790
    %v792 = vlaneseq
    %v793 = vshrl.u32 %v792, 7
    %v794 = vsub.s32 4, %v793
    %v795 = vrot.slane %v731, %v794
    %v796 = vlaneseq
    %v797 = vshrl.u32 %v796, 7
    %v798 = vsub.s32 5, %v797
    %v799 = vrot.slane %v731, %v798
    %v800 = vlaneseq
    %v801 = vshrl.u32 %v800, 7
    %v802 = vsub.s32 6, %v801
    %v803 = vrot.slane %v731, %v802
    %v804 = vlaneseq
    %v805 = vshrl.u32 %v804, 7
    %v806 = vsub.s32 7, %v805
    %v807 = vrot.slane %v731, %v806
    %v808 = vlaneseq
    %v809 = vshrl.u32 %v808, 7
    %v810 = vsub.s32 0, %v809
    %v811 = vrot.slane %v733, %v810
    %v812 = vlaneseq
    %v813 = vshrl.u32 %v812, 7
    %v814 = vsub.s32 1, %v813
    %v815 = vrot.slane %v733, %v814
    %v816 = vlaneseq
    %v817 = vshrl.u32 %v816, 7
    %v818 = vsub.s32 2, %v817
    %v819 = vrot.slane %v733, %v818
    %v820 = vlaneseq
    %v821 = vshrl.u32 %v820, 7
    %v822 = vsub.s32 3, %v821
    %v823 = vrot.slane %v733, %v822
    %v824 = vlaneseq
    %v825 = vshrl.u32 %v824, 7
    %v826 = vsub.s32 4, %v825
    %v827 = vrot.slane %v733, %v826
    %v828 = vlaneseq
    %v829 = vshrl.u32 %v828, 7
    %v830 = vsub.s32 5, %v829
    %v831 = vrot.slane %v733, %v830
    %v832 = vlaneseq
    %v833 = vshrl.u32 %v832, 7
    %v834 = vsub.s32 6, %v833
    %v835 = vrot.slane %v733, %v834
    %v836 = vlaneseq
    %v837 = vshrl.u32 %v836, 7
    %v838 = vsub.s32 7, %v837
    %v839 = vrot.slane %v733, %v838
    %v840 = vlaneseq
    %v841 = vshrl.u32 %v840, 7
    %v842 = vsub.s32 0, %v841
    %v843 = vrot.slane %v735, %v842
    %v844 = vlaneseq
    %v845 = vshrl.u32 %v844, 7
    %v846 = vsub.s32 1, %v845
    %v847 = vrot.slane %v735, %v846
    %v848 = vlaneseq
    %v849 = vshrl.u32 %v848, 7
    %v850 = vsub.s32 2, %v849
    %v851 = vrot.slane %v735, %v850
    %v852 = vlaneseq
    %v853 = vshrl.u32 %v852, 7
    %v854 = vsub.s32 3, %v853
    %v855 = vrot.slane %v735, %v854
    %v856 = vlaneseq
    %v857 = vshrl.u32 %v856, 7
    %v858 = vsub.s32 4, %v857
    %v859 = vrot.slane %v735, %v858
    %v860 = vlaneseq
    %v861 = vshrl.u32 %v860, 7
    %v862 = vsub.s32 5, %v861
    %v863 = vrot.slane %v735, %v862
    %v864 = vlaneseq
    %v865 = vshrl.u32 %v864, 7
    %v866 = vsub.s32 6, %v865
    %v867 = vrot.slane %v735, %v866
    %v868 = vlaneseq
    %v869 = vshrl.u32 %v868, 7
    %v870 = vsub.s32 7, %v869
    %v871 = vrot.slane %v735, %v870
    %v872 = vcombine.low %v747, %v751
    %v873 = vcombine.low %v755, %v759
    %v874 = vcombine.low %v763, %v767
    %v875 = vcombine.low %v771, %v775
    %v877 = vunpack.c.l.s4 1966171168
    %v878 = vunpack.c.0.s8 %v877
    %v879 = vlaneseq
    %v880 = vshrl.u32 %v879, 7
    %v881 = vsub.s32 %v878, %v880
    %v882 = vrot.slane %v872, %v881
    %v884 = vunpack.c.l.s4 1966171168
    %v885 = vunpack.c.0.s8 %v884
    %v886 = vlaneseq
    %v887 = vshrl.u32 %v886, 7
    %v888 = vsub.s32 %v885, %v887
    %v889 = vrot.slane %v873, %v888
    %v891 = vunpack.c.l.s4 1966171168
    %v892 = vunpack.c.0.s8 %v891
    %v893 = vlaneseq
    %v894 = vshrl.u32 %v893, 7
    %v895 = vsub.s32 %v892, %v894
    %v896 = vrot.slane %v874, %v895
    %v898 = vunpack.c.l.s4 1966171168
    %v899 = vunpack.c.0.s8 %v898
    %v900 = vlaneseq
    %v901 = vshrl.u32 %v900, 7
    %v902 = vsub.s32 %v899, %v901
    %v903 = vrot.slane %v875, %v902
    %v904 = vcombine.low %v882, %v889
    %v905 = vcombine.low %v896, %v903
    %v907 = vunpack.c.l.s4 1966171168
    %v908 = vunpack.c.0.s8 %v907
    %v909 = vlaneseq
    %v910 = vshrl.u32 %v909, 7
    %v911 = vsub.s32 %v908, %v910
    %v912 = vrot.slane %v904, %v911
    %v914 = vunpack.c.l.s4 1966171168
    %v915 = vunpack.c.0.s8 %v914
    %v916 = vlaneseq
    %v917 = vshrl.u32 %v916, 7
    %v918 = vsub.s32 %v915, %v917
    %v919 = vrot.slane %v905, %v918
    %v920 = vcombine.low %v912, %v919
    %v921 = vcombine.low %v779, %v783
    %v922 = vcombine.low %v787, %v791
    %v923 = vcombine.low %v795, %v799
    %v924 = vcombine.low %v803, %v807
    %v926 = vunpack.c.l.s4 1966171168
    %v927 = vunpack.c.0.s8 %v926
    %v928 = vlaneseq
    %v929 = vshrl.u32 %v928, 7
    %v930 = vsub.s32 %v927, %v929
    %v931 = vrot.slane %v921, %v930
    %v933 = vunpack.c.l.s4 1966171168
    %v934 = vunpack.c.0.s8 %v933
    %v935 = vlaneseq
    %v936 = vshrl.u32 %v935, 7
    %v937 = vsub.s32 %v934, %v936
    %v938 = vrot.slane %v922, %v937
    %v940 = vunpack.c.l.s4 1966171168
    %v941 = vunpack.c.0.s8 %v940
    %v942 = vlaneseq
    %v943 = vshrl.u32 %v942, 7
    %v944 = vsub.s32 %v941, %v943
    %v945 = vrot.slane %v923, %v944
    %v947 = vunpack.c.l.s4 1966171168
    %v948 = vunpack.c.0.s8 %v947
    %v949 = vlaneseq
    %v950 = vshrl.u32 %v949, 7
    %v951 = vsub.s32 %v948, %v950
    %v952 = vrot.slane %v924, %v951
    %v953 = vcombine.low %v931, %v938
    %v954 = vcombine.low %v945, %v952
    %v956 = vunpack.c.l.s4 1966171168
    %v957 = vunpack.c.0.s8 %v956
    %v958 = vlaneseq
    %v959 = vshrl.u32 %v958, 7
    %v960 = vsub.s32 %v957, %v959
    %v961 = vrot.slane %v953, %v960
    %v963 = vunpack.c.l.s4 1966171168
    %v964 = vunpack.c.0.s8 %v963
    %v965 = vlaneseq
    %v966 = vshrl.u32 %v965, 7
    %v967 = vsub.s32 %v964, %v966
    %v968 = vrot.slane %v954, %v967
    %v969 = vcombine.low %v961, %v968
    %v970 = vcombine.low %v811, %v815
    %v971 = vcombine.low %v819, %v823
    %v972 = vcombine.low %v827, %v831
    %v973 = vcombine.low %v835, %v839
    %v975 = vunpack.c.l.s4 1966171168
    %v976 = vunpack.c.0.s8 %v975
    %v977 = vlaneseq
    %v978 = vshrl.u32 %v977, 7
    %v979 = vsub.s32 %v976, %v978
    %v980 = vrot.slane %v970, %v979
    %v982 = vunpack.c.l.s4 1966171168
    %v983 = vunpack.c.0.s8 %v982
    %v984 = vlaneseq
    %v985 = vshrl.u32 %v984, 7
    %v986 = vsub.s32 %v983, %v985
    %v987 = vrot.slane %v971, %v986
    %v989 = vunpack.c.l.s4 1966171168
    %v990 = vunpack.c.0.s8 %v989
    %v991 = vlaneseq
    %v992 = vshrl.u32 %v991, 7
    %v993 = vsub.s32 %v990, %v992
    %v994 = vrot.slane %v972, %v993
    %v996 = vunpack.c.l.s4 1966171168
    %v997 = vunpack.c.0.s8 %v996
    %v998 = vlaneseq
    %v999 = vshrl.u32 %v998, 7
    %v1000 = vsub.s32 %v997, %v999
    %v1001 = vrot.slane %v973, %v1000
    %v1002 = vcombine.low %v980, %v987
    %v1003 = vcombine.low %v994, %v1001
    %v1005 = vunpack.c.l.s4 1966171168
    %v1006 = vunpack.c.0.s8 %v1005
    %v1007 = vlaneseq
    %v1008 = vshrl.u32 %v1007, 7
    %v1009 = vsub.s32 %v1006, %v1008
    %v1010 = vrot.slane %v1002, %v1009
    %v1012 = vunpack.c.l.s4 1966171168
    %v1013 = vunpack.c.0.s8 %v1012
    %v1014 = vlaneseq
    %v1015 = vshrl.u32 %v1014, 7
    %v1016 = vsub.s32 %v1013, %v1015
    %v1017 = vrot.slane %v1003, %v1016
    %v1018 = vcombine.low %v1010, %v1017
    %v1019 = vcombine.low %v843, %v847
    %v1020 = vcombine.low %v851, %v855
    %v1021 = vcombine.low %v859, %v863
    %v1022 = vcombine.low %v867, %v871
    %v1024 = vunpack.c.l.s4 1966171168
    %v1025 = vunpack.c.0.s8 %v1024
    %v1026 = vlaneseq
    %v1027 = vshrl.u32 %v1026, 7
    %v1028 = vsub.s32 %v1025, %v1027
    %v1029 = vrot.slane %v1019, %v1028
    %v1031 = vunpack.c.l.s4 1966171168
    %v1032 = vunpack.c.0.s8 %v1031
    %v1033 = vlaneseq
    %v1034 = vshrl.u32 %v1033, 7
    %v1035 = vsub.s32 %v1032, %v1034
    %v1036 = vrot.slane %v1020, %v1035
    %v1038 = vunpack.c.l.s4 1966171168
    %v1039 = vunpack.c.0.s8 %v1038
    %v1040 = vlaneseq
    %v1041 = vshrl.u32 %v1040, 7
    %v1042 = vsub.s32 %v1039, %v1041
    %v1043 = vrot.slane %v1021, %v1042
    %v1045 = vunpack.c.l.s4 1966171168
    %v1046 = vunpack.c.0.s8 %v1045
    %v1047 = vlaneseq
    %v1048 = vshrl.u32 %v1047, 7
    %v1049 = vsub.s32 %v1046, %v1048
    %v1050 = vrot.slane %v1022, %v1049
    %v1051 = vcombine.low %v1029, %v1036
    %v1052 = vcombine.low %v1043, %v1050
    %v1054 = vunpack.c.l.s4 1966171168
    %v1055 = vunpack.c.0.s8 %v1054
    %v1056 = vlaneseq
    %v1057 = vshrl.u32 %v1056, 7
    %v1058 = vsub.s32 %v1055, %v1057
    %v1059 = vrot.slane %v1051, %v1058
    %v1061 = vunpack.c.l.s4 1966171168
    %v1062 = vunpack.c.0.s8 %v1061
    %v1063 = vlaneseq
    %v1064 = vshrl.u32 %v1063, 7
    %v1065 = vsub.s32 %v1062, %v1064
    %v1066 = vrot.slane %v1052, %v1065
    %v1067 = vcombine.low %v1059, %v1066
    %1068 = vset.pattern.permute.xlu0 0
    %1069 = vperm.xlu0 %1068, %v920
    %v1070 = vpop.permute.xlu0 %1069
    %1071 = vset.pattern.permute.xlu0 0
    %1072 = vperm.xlu0 %1071, %v969
    %v1073 = vpop.permute.xlu0 %1072
    %1074 = vset.pattern.permute.xlu0 0
    %1075 = vperm.xlu0 %1074, %v1018
    %v1076 = vpop.permute.xlu0 %1075
    %1077 = vset.pattern.permute.xlu0 0
    %1078 = vperm.xlu0 %1077, %v1067
    %v1079 = vpop.permute.xlu0 %1078
    %v1080 = vlaneseq
    %v1081 = vand.u32 %v1080, 127
    %v1082 = vlaneseq
    %v1083 = vshrl.u32 %v1082, 7
    %v1084 = vsub.s32 %v1081, %v1083
    %v1085 = vrot.slane %v1070, %v1084
    %v1086 = vadd.s32 %v1081, 4294967288
    %v1087 = vlaneseq
    %v1088 = vshrl.u32 %v1087, 7
    %v1089 = vsub.s32 %v1086, %v1088
    %v1090 = vrot.slane %v1073, %v1089
    %vm1091 = vcmask 130112
    %v1092 = vsel %vm1091, %v1090, %v1085
    %v1093 = vlaneseq
    %v1094 = vshrl.u32 %v1093, 7
    %v1095 = vsub.s32 %v1081, %v1094
    %v1096 = vrot.slane %v1076, %v1095
    %v1097 = vlaneseq
    %v1098 = vshrl.u32 %v1097, 7
    %v1099 = vsub.s32 %v1086, %v1098
    %v1100 = vrot.slane %v1079, %v1099
    %v1101 = vsel %vm1091, %v1100, %v1096
    %v1103 = vunpack.c.l.s4 1966171168
    %v1104 = vunpack.c.0.s8 %v1103
    %v1105 = vlaneseq
    %v1106 = vshrl.u32 %v1105, 7
    %v1107 = vsub.s32 %v1104, %v1106
    %v1108 = vrot.slane %v1092, %v1107
    %v1110 = vunpack.c.l.s4 1966171168
    %v1111 = vunpack.c.0.s8 %v1110
    %v1112 = vlaneseq
    %v1113 = vshrl.u32 %v1112, 7
    %v1114 = vsub.s32 %v1111, %v1113
    %v1115 = vrot.slane %v1108, %v1114
    %v1117 = vunpack.c.l.s4 1966171168
    %v1118 = vunpack.c.0.s8 %v1117
    %v1119 = vlaneseq
    %v1120 = vshrl.u32 %v1119, 7
    %v1121 = vsub.s32 %v1118, %v1120
    %v1122 = vrot.slane %v1101, %v1121
    %v1124 = vunpack.c.l.s4 1966171168
    %v1125 = vunpack.c.0.s8 %v1124
    %v1126 = vlaneseq
    %v1127 = vshrl.u32 %v1126, 7
    %v1128 = vsub.s32 %v1125, %v1127
    %v1129 = vrot.slane %v1122, %v1128
    %v1132 = vsel %vm738, %v1115, -1e+09
    %v1133 = vsel %vm739, %v1129, -1e+09
    %v1136 = vcombine.low %v1132, %v1133
    %v1138 = vunpack.c.l.s4 1966171168
    %v1139 = vunpack.c.0.s8 %v1138
    %v1140 = vlaneseq
    %v1141 = vshrl.u32 %v1140, 7
    %v1142 = vsub.s32 %v1139, %v1141
    %v1143 = vrot.slane %v1136, %v1142
    %v1145 = vunpack.c.l.s4 1966171168
    %v1146 = vunpack.c.0.s8 %v1145
    %v1147 = vlaneseq
    %v1148 = vshrl.u32 %v1147, 7
    %v1149 = vsub.s32 %v1146, %v1148
    %v1150 = vrot.slane %v1143, %v1149
    %vm1152 = vcmask 123904
    %v1153 = vsel %vm1152, %v1150, -inf
    %1154 = vmax.xlane.f32.xlu0 %v1153
    %v1155 = vpop.xlane.xlu0 %1154
    %v1157 = vlaneseq
    %v1158 = vshrl.u32 %v1157, 7
    %v1159 = vsub.s32 0, %v1158
    %v1160 = vrot.slane %v1155, %v1159
    %v1161 = vlaneseq
    %v1162 = vshrl.u32 %v1161, 7
    %v1163 = vsub.s32 1, %v1162
    %v1164 = vrot.slane %v1155, %v1163
    %v1167 = vsub.f32 %v1132, %v1160
    %v1168 = vsub.f32 %v1133, %v1164
    %v1169 = vmul.f32 %v1167, 1.442695
    %v1170 = vpow.pop %v1169
    %v1171 = vmul.f32 %v1168, 1.442695
    %v1172 = vpow.pop %v1171
    %v1175 = vcombine.low %v1170, %v1172
    %v1177 = vunpack.c.l.s4 1966171168
    %v1178 = vunpack.c.0.s8 %v1177
    %v1179 = vlaneseq
    %v1180 = vshrl.u32 %v1179, 7
    %v1181 = vsub.s32 %v1178, %v1180
    %v1182 = vrot.slane %v1175, %v1181
    %v1184 = vunpack.c.l.s4 1966171168
    %v1185 = vunpack.c.0.s8 %v1184
    %v1186 = vlaneseq
    %v1187 = vshrl.u32 %v1186, 7
    %v1188 = vsub.s32 %v1185, %v1187
    %v1189 = vrot.slane %v1182, %v1188
    %v1191 = vsel %vm1152, %v1189, 0.0
    %1192 = vadd.xlane.f32.xlu0 %v1191
    %v1193 = vpop.xlane.xlu0 %1192
    %v1195 = vlaneseq
    %v1196 = vshrl.u32 %v1195, 7
    %v1197 = vsub.s32 0, %v1196
    %v1198 = vrot.slane %v1193, %v1197
    %v1199 = vlaneseq
    %v1200 = vshrl.u32 %v1199, 7
    %v1201 = vsub.s32 1, %v1200
    %v1202 = vrot.slane %v1193, %v1201
    %v1205 = vrcp.pop %v1198
    %v1206 = vmul.f32 %v1170, %v1205
    %v1207 = vrcp.pop %v1202
    %v1208 = vmul.f32 %v1172, %v1207
    %v1209 = vlaneseq
    %v1210 = vshrl.u32 %v1209, 7
    %v1211 = vsub.s32 0, %v1210
    %v1212 = vrot.slane %v1206, %v1211
    %1214 = vbcast.lane.b32.xlu0 %v1212, 256
    %v1215 = vpop.permute.xlu0 %1214
    %s1217 = sor.u32 256, 8
    %1218 = vbcast.lane.b32.xlu0 %v1212, %s1217
    %v1219 = vpop.permute.xlu0 %1218
    %v1220 = vlaneseq
    %v1221 = vshrl.u32 %v1220, 7
    %v1222 = vsub.s32 0, %v1221
    %v1223 = vrot.slane %v1208, %v1222
    %1225 = vbcast.lane.b32.xlu0 %v1223, 256
    %v1226 = vpop.permute.xlu0 %1225
    %s1228 = sor.u32 256, 8
    %1229 = vbcast.lane.b32.xlu0 %v1223, %s1228
    %v1230 = vpop.permute.xlu0 %1229
    %v1231 = vmul.f32 %v1215, %v155
    %v1232 = vmul.f32 %v1219, %v158
    %v1233 = vmul.f32 %v1226, %v163
    %v1234 = vmul.f32 %v1230, %v166
    %v1235 = vadd.f32 %v1231, %v1232
    %v1236 = vrot.slane %v1235, 4
    %v1237 = vadd.f32 %v1235, %v1236
    %v1238 = vrot.slane %v1237, 2
    %v1239 = vadd.f32 %v1237, %v1238
    %v1240 = vrot.slane %v1239, 1
    %v1241 = vadd.f32 %v1239, %v1240
    %v1242 = vadd.f32 %v1233, %v1234
    %v1243 = vrot.slane %v1242, 4
    %v1244 = vadd.f32 %v1242, %v1243
    %v1245 = vrot.slane %v1244, 2
    %v1246 = vadd.f32 %v1244, %v1245
    %v1247 = vrot.slane %v1246, 1
    %v1248 = vadd.f32 %v1246, %v1247
    %v1249 = vpack.c.bf16 %v1241, %v1241
    %v1250 = vpack.c.bf16 %v1248, %v1248
    %v1251 = vld [vmem:[%s11] sm:$0xf]
    %v1252 = vld [vmem:[%s11 + $0x4] sm:$0xf]
    %v1253 = vld [vmem:[%s11 + $0x8] sm:$0xf]
    %v1254 = vld [vmem:[%s11 + $0xc] sm:$0xf]
    %v1255 = vld [vmem:[%s11 + $0x10] sm:$0xf]
    %v1256 = vld [vmem:[%s11 + $0x14] sm:$0xf]
    %v1257 = vld [vmem:[%s11 + $0x18] sm:$0xf]
    %v1258 = vld [vmem:[%s11 + $0x1c] sm:$0xf]
    %v1259 = vld [vmem:[%s11 + $0x20] sm:$0xf]
    %v1260 = vld [vmem:[%s11 + $0x24] sm:$0xf]
    %v1261 = vld [vmem:[%s11 + $0x28] sm:$0xf]
    %v1262 = vld [vmem:[%s11 + $0x2c] sm:$0xf]
    %v1263 = vld [vmem:[%s11 + $0x30] sm:$0xf]
    %v1264 = vld [vmem:[%s11 + $0x34] sm:$0xf]
    %v1265 = vld [vmem:[%s11 + $0x38] sm:$0xf]
    %v1266 = vld [vmem:[%s11 + $0x3c] sm:$0xf]
    %v1267 = vld [vmem:[%s12] sm:$0x1]
    %v1269 = vlaneseq
    %v1270 = vshrl.u32 %v1269, 7
    %v1271 = vsub.s32 0, %v1270
    %v1272 = vrot.slane %v1267, %v1271
    %v1276 = vunpack.c.l.b16 %v1249
    %v1277 = vunpack.c.l.b16 %v1250
    %vm1278 = vcmask 1041409
    %v1279 = vsel %vm1278, %v1277, %v1276
    %v1280 = vpack.c.b16 %v1279, %v1279
    %v1298 = vunpack.c.l.b16 %v1251
    %v1299 = vunpack.c.l.b16 %v1252
    %v1300 = vunpack.c.l.b16 %v1253
    %v1301 = vunpack.c.l.b16 %v1254
    %v1302 = vunpack.c.l.b16 %v1255
    %v1303 = vunpack.c.l.b16 %v1256
    %v1304 = vunpack.c.l.b16 %v1257
    %v1305 = vunpack.c.l.b16 %v1258
    %v1306 = vunpack.c.l.b16 %v1259
    %v1307 = vunpack.c.l.b16 %v1260
    %v1308 = vunpack.c.l.b16 %v1261
    %v1309 = vunpack.c.l.b16 %v1262
    %v1310 = vunpack.c.l.b16 %v1263
    %v1311 = vunpack.c.l.b16 %v1264
    %v1312 = vunpack.c.l.b16 %v1265
    %v1313 = vunpack.c.l.b16 %v1266
    %v1314 = vpack.c.b16 %v1299, %v1298
    %v1315 = vpack.c.b16 %v1301, %v1300
    %v1316 = vpack.c.b16 %v1303, %v1302
    %v1317 = vpack.c.b16 %v1305, %v1304
    %v1318 = vpack.c.b16 %v1307, %v1306
    %v1319 = vpack.c.b16 %v1309, %v1308
    %v1320 = vpack.c.b16 %v1311, %v1310
    %v1321 = vpack.c.b16 %v1313, %v1312
    %1330 = vmatprep.subr.bf16.mxu0 0
    %1331 = vmatpush1.bf16.msra.mxu0 %v1314
    %1332 = vmatprep.subr.bf16.mxu0 0
    %1333 = vmatpush1.bf16.msra.mxu0 %v1315
    %1334 = vmatprep.subr.bf16.mxu0 0
    %1335 = vmatpush1.bf16.msra.mxu0 %v1316
    %1336 = vmatprep.subr.bf16.mxu0 0
    %1337 = vmatpush1.bf16.msra.mxu0 %v1317
    %1338 = vmatprep.subr.bf16.mxu0 0
    %1339 = vmatpush1.bf16.msra.mxu0 %v1318
    %1340 = vmatprep.subr.bf16.mxu0 0
    %1341 = vmatpush1.bf16.msra.mxu0 %v1319
    %1342 = vmatprep.subr.bf16.mxu0 0
    %1343 = vmatpush1.bf16.msra.mxu0 %v1320
    %1344 = vmatprep.subr.bf16.mxu0 0
    %1345 = vmatpush1.bf16.msra.mxu0 %v1321
    %1346 = vmatprep.subr.bf16.mxu0 0
    %1347 = vmatpush1.bf16.msra.mxu0 0
    %1348 = vmatprep.subr.bf16.mxu0 0
    %1349 = vmatpush1.bf16.msra.mxu0 0
    %1350 = vmatprep.subr.bf16.mxu0 0
    %1351 = vmatpush1.bf16.msra.mxu0 0
    %1352 = vmatprep.subr.bf16.mxu0 0
    %1353 = vmatpush1.bf16.msra.mxu0 0
    %1354 = vmatprep.subr.bf16.mxu0 0
    %1355 = vmatpush1.bf16.msra.mxu0 0
    %1356 = vmatprep.subr.bf16.mxu0 0
    %1357 = vmatpush1.bf16.msra.mxu0 0
    %1358 = vmatprep.subr.bf16.mxu0 0
    %1359 = vmatpush1.bf16.msra.mxu0 0
    %1360 = vmatprep.subr.bf16.mxu0 0
    %1361 = vmatpush1.bf16.msra.mxu0 0
    %1362 = vmatprep.mubr.bf16.mxu0 0
    %1363 = vmatmul.mubr.bf16.gmra.mrb[0].mxu0 %v1280
    %v1364 = vpop.f32.mrb[0].mxu0
    %v1365 = vadd.f32 %v1272, %v1364
    %v1366 = vpop.f32.mrb[0].mxu0
    %v1367 = vpop.f32.mrb[0].mxu0
    %v1368 = vpop.f32.mrb[0].mxu0
    %1369 = vdwg.mxu0
    %v1372 = vunpack.c.l.s4 1966171168
    %v1373 = vunpack.c.0.s8 %v1372
    %v1374 = vlaneseq
    %v1375 = vshrl.u32 %v1374, 7
    %v1376 = vsub.s32 %v1373, %v1375
    %v1377 = vrot.slane %v1365, %v1376
    %v1378 = vcombine.high %v1377, %v1377
    %v1380 = vunpack.c.l.s4 1966171168
    %v1381 = vunpack.c.0.s8 %v1380
    %v1382 = vlaneseq
    %v1383 = vshrl.u32 %v1382, 7
    %v1384 = vsub.s32 %v1381, %v1383
    %v1385 = vrot.slane %v1377, %v1384
    %v1387 = vunpack.c.l.s4 1966171168
    %v1388 = vunpack.c.0.s8 %v1387
    %v1389 = vlaneseq
    %v1390 = vshrl.u32 %v1389, 7
    %v1391 = vsub.s32 %v1388, %v1390
    %v1392 = vrot.slane %v1378, %v1391
    %1395 = vst [vmem:[#allocation4] sm:$0x1] %v1385
    %1396 = vst [vmem:[#allocation4 + $0x1] sm:$0x1] %v1392
    %vm1397 = vcmask 122880
    %1398 = vst.msk [vmem:[#allocation6] sm:$0x1] %vm1397, %v1206
    %1399 = vst.msk [vmem:[#allocation6 + $0x1] sm:$0x1] %vm1397, %v1208
    %vm1400 = vcmask 1040512
    %1401 = vst.msk [vmem:[#allocation6] sm:$0x1] %vm1400, 0.0
    %1402 = vst.msk [vmem:[#allocation6 + $0x1] sm:$0x1] %vm1400, 0.0
    // Predicated region
    $region54: #{depgcn_v2_forward.1} parent=1 // pred_check
      _
    $region55: #{depgcn_v2_forward.1} parent=1 // pred_check_branch
      %1404 = sbr.rel (0) target = $region57
    $region56: #{depgcn_v2_forward.1} parent=1 // pred_region
      %s1406 = ssub.s32 512, 512
      %1407 = vsyncadd [#allocation3], %s1406
      %s1408 = sshll.u32 [#allocation2], 4
      %s1409 = int_to_ptr.vmem [resolvable:$true] %s1408
      %1414 = dma.vmem_to_hbm [thread:$0]  %s1409, 512, %s13, [#allocation3], 128, 128, 8
    $region57: #{depgcn_v2_forward.1} parent=1 // pred_fallthru
      _
    // Predicated region
    $region58: #{depgcn_v2_forward.1} parent=1 // pred_check
      _
    $region59: #{depgcn_v2_forward.1} parent=1 // pred_check_branch
      %1416 = sbr.rel (0) target = $region61
    $region60: #{depgcn_v2_forward.1} parent=1 // pred_region
      %s1418 = ssub.s32 32, 32
      %1419 = vsyncadd [#allocation5], %s1418
      %s1420 = sshll.u32 [#allocation4], 4
      %s1421 = int_to_ptr.vmem [resolvable:$true] %s1420
      %1426 = dma.vmem_to_hbm [thread:$0]  %s1421, 32, %s14, [#allocation5], 16, 16, 1
    $region61: #{depgcn_v2_forward.1} parent=1 // pred_fallthru
      _
    // Predicated region
    $region62: #{depgcn_v2_forward.1} parent=1 // pred_check
      _
    $region63: #{depgcn_v2_forward.1} parent=1 // pred_check_branch
      %1428 = sbr.rel (0) target = $region65
    $region64: #{depgcn_v2_forward.1} parent=1 // pred_region
      %s1430 = ssub.s32 32, 32
      %1431 = vsyncadd [#allocation5], %s1430
      %s1432 = sshll.u32 [#allocation6], 4
      %s1433 = int_to_ptr.vmem [resolvable:$true] %s1432
      %1438 = dma.vmem_to_hbm [thread:$0]  %s1433, 32, %s15, [#allocation5], 16, 16, 1
    $region65: #{depgcn_v2_forward.1} parent=1 // pred_fallthru
      _
    // Predicated region
    $region66: #{depgcn_v2_forward.1} parent=1 // pred_check
      _
    $region67: #{depgcn_v2_forward.1} parent=1 // pred_check_branch
      %1440 = sbr.rel (0) target = $region69
    $region68: #{depgcn_v2_forward.1} parent=1 // pred_region
      %1441 = dma.done [#allocation3], 512
    $region69: #{depgcn_v2_forward.1} parent=1 // pred_fallthru
      _
    // Predicated region
    $region70: #{depgcn_v2_forward.1} parent=1 // pred_check
      _
    $region71: #{depgcn_v2_forward.1} parent=1 // pred_check_branch
      %1443 = sbr.rel (0) target = $region73
    $region72: #{depgcn_v2_forward.1} parent=1 // pred_region
      %1444 = dma.done [#allocation5], 32
    $region73: #{depgcn_v2_forward.1} parent=1 // pred_fallthru
      _
    // Predicated region
    $region74: #{depgcn_v2_forward.1} parent=1 // pred_check
      _
    $region75: #{depgcn_v2_forward.1} parent=1 // pred_check_branch
      %1446 = sbr.rel (0) target = $region77
    $region76: #{depgcn_v2_forward.1} parent=1 // pred_region
      %1447 = dma.done [#allocation5], 32
    $region77: #{depgcn_v2_forward.1} parent=1 // pred_fallthru
      _
    %1448 = vsyncpa [#allocation3], 1
    %1449 = vsyncpa [#allocation5], 1

</llo_original>
